<compile_context>
chip_gen: v5e
topology: v5e:2x2
jax: 0.10.0
libtpu: 0.0.40
codegen_flags: <defaults>
</compile_context>

<pallas_src>
import jax
import jax.numpy as jnp
from jax.experimental import pallas as pl
from jax.experimental.pallas import tpu as pltpu


def _round_up(x: int, m: int) -> int:
    return ((x + m - 1) // m) * m


def _sublane_multiple(dtype) -> int:
    # 8 sublanes for 32-bit, 16 for 16-bit, 32 for 8-bit packed dtypes.
    return 8 * max(1, 4 // jnp.dtype(dtype).itemsize)


def _encode_kernel(lang_ref, w_ref, sel_ref, b_ref, point_ref, mask_ref, out_ref):
    # Language half, already placed in lanes [0, Nh): W was zero-padded to (K, dim).
    y = jnp.dot(lang_ref[...], w_ref[...], preferred_element_type=jnp.float32)
    # Point half placed in lanes [Nh, dim) via the constant [0 | I] selector
    # (exact pass-through; avoids unaligned lane concats / sliced stores).
    p = jnp.dot(point_ref[...], sel_ref[...], preferred_element_type=jnp.float32)
    m = mask_ref[...]                                    # (tm, 1) -> lane broadcast
    out_ref[...] = ((y + p + b_ref[...]) * m).astype(out_ref.dtype)


def encode_dual_conditioning_pe(
    language, point, mask, weight_t, bias, *, tm=512, compute_dtype=None
):
    """language: [B,S,4096], point: [B,S,dim//2], mask: [B,S],
    weight_t: [4096, dim//2] (transposed torch Linear weight), bias: [dim//2].

    compute_dtype: optionally cast language/weight to e.g. jnp.bfloat16 for the
    MXU stream (accumulation stays float32; only worthwhile when `language`
    already arrives in that dtype / the cast fuses upstream). Note bf16 compute
    will not meet tight f32 allclose tolerances.
    """
    B, S, K = language.shape
    Nh = weight_t.shape[1]
    assert weight_t.shape[0] == K
    assert point.shape == (B, S, Nh)
    assert mask.shape == (B, S)
    dim = 2 * Nh
    M = B * S
    out_dtype = language.dtype

    lang2d = language.reshape(M, K)
    point2d = point.reshape(M, Nh)
    mask2d = mask.reshape(M, 1).astype(jnp.float32)

    # Parameter-side prep (parameter-sized, negligible vs the M*K activation
    # stream; in production these would be precomputed once per checkpoint).
    w_pad = jnp.pad(weight_t, ((0, 0), (0, Nh)))                       # (K, dim) = [W | 0]
    b_pad = jnp.pad(bias.astype(jnp.float32).reshape(1, Nh),
                    ((0, 0), (0, Nh)))                                 # (1, dim)
    sel = jnp.pad(jnp.eye(Nh, dtype=point2d.dtype), ((0, 0), (Nh, 0)))  # (Nh, dim) = [0 | I]

    if compute_dtype is not None:
        lang2d = lang2d.astype(compute_dtype)
        w_pad = w_pad.astype(compute_dtype)

    # --- M tiling -------------------------------------------------------------
    sub = max(_sublane_multiple(lang2d.dtype),
              _sublane_multiple(point2d.dtype),
              _sublane_multiple(out_dtype))
    tm = max(sub, min(tm, _round_up(M, sub)))
    # Ensure >= 2 M tiles so both v7x TensorCores get work (when M allows).
    if M >= 2 * sub and pl.cdiv(M, tm) < 2:
        tm = _round_up(pl.cdiv(M, 2), sub)

    lang_item = jnp.dtype(lang2d.dtype).itemsize
    pt_item = jnp.dtype(point2d.dtype).itemsize
    out_item = jnp.dtype(out_dtype).itemsize

    def _vmem_needed(tm_):
        # Double-buffered working set of all blocks.
        return 2 * (tm_ * K * lang_item + K * dim * lang_item + Nh * dim * pt_item
                    + dim * 4 + tm_ * Nh * pt_item + tm_ * 4 + tm_ * dim * out_item)

    VMEM_BUDGET = 48 << 20        # conservative: leaves headroom on v7x (64 MiB phys)
    while tm > sub and _vmem_needed(tm) > VMEM_BUDGET:
        tm = max(sub, _round_up(tm // 2, sub))

    grid_m = pl.cdiv(M, tm)
    vmem_limit = int(min(max(_vmem_needed(tm) + (8 << 20), 32 << 20), 56 << 20))

    flops = 2 * M * K * dim + 2 * M * Nh * dim
    bytes_accessed = (M * K * lang_item + K * dim * lang_item + M * Nh * pt_item
                      + M * 4 + Nh * dim * pt_item + dim * 4 + M * dim * out_item)

    out2d = pl.pallas_call(
        _encode_kernel,
        out_shape=jax.ShapeDtypeStruct((M, dim), out_dtype),
        grid=(grid_m,),
        in_specs=[
            pl.BlockSpec((tm, K), lambda i: (i, 0)),     # language tile
            pl.BlockSpec((K, dim), lambda i: (0, 0)),    # padded weight (VMEM resident)
            pl.BlockSpec((Nh, dim), lambda i: (0, 0)),   # [0 | I] selector (resident)
            pl.BlockSpec((1, dim), lambda i: (0, 0)),    # padded bias (resident)
            pl.BlockSpec((tm, Nh), lambda i: (i, 0)),    # point tile
            pl.BlockSpec((tm, 1), lambda i: (i, 0)),     # mask tile
        ],
        out_specs=pl.BlockSpec((tm, dim), lambda i: (i, 0)),
        compiler_params=pltpu.CompilerParams(
            dimension_semantics=("parallel",),
            vmem_limit_bytes=vmem_limit,
        ),
        cost_estimate=pl.CostEstimate(
            flops=flops, transcendentals=0, bytes_accessed=bytes_accessed
        ),
    )(lang2d, w_pad, sel, b_pad, point2d, mask2d)

    return out2d.reshape(B, S, dim)


if __name__ == "__main__":
    # Small, module-consistent shapes (K = 4096 is fixed by nn.Linear(4096, dim//2)).
    B, S = 2, 8
    K = 4096
    dim = 64
    Nh = dim // 2

    key = jax.random.PRNGKey(0)
    k1, k2, k3, k4, k5 = jax.random.split(key, 5)

    # Deterministic synthetic "parameters" (torch Linear layout is (out, in)).
    weight = jax.random.normal(k4, (Nh, K), jnp.float32) * 0.02
    bias = jax.random.normal(k5, (Nh,), jnp.float32) * 0.02
    weight_t = weight.T                                            # (K, Nh)

    # Inputs.
    language = jax.random.normal(k1, (B, S, K), jnp.float32)
    point = jax.random.normal(k2, (B, S, Nh), jnp.float32)
    mask = (jax.random.uniform(k3, (B, S)) > 0.3).astype(jnp.float32)

    out = encode_dual_conditioning_pe(language, point, mask, weight_t, bias)
    out = jax.block_until_ready(out)

    # Reference check in plain JAX (same math as the torch module).
    ref_lang = (language @ weight_t + bias) * mask[..., None]
    ref_point = point * mask[..., None]
    ref = jnp.concatenate([ref_lang, ref_point], axis=-1)
    assert out.shape == (B, S, dim)
    assert jnp.allclose(out, ref, atol=1e-4, rtol=1e-4)

    print("KERNEL_OK")
</pallas_src>

<mosaic_0001>
module attributes {stable_mosaic.version = 11 : i64} {
  func.func @_encode_kernel(%arg0: i32, %arg1: memref<8x4096xf32, #tpu.memory_space<vmem>>, %arg2: memref<4096x64xf32, #tpu.memory_space<vmem>>, %arg3: memref<32x64xf32, #tpu.memory_space<vmem>>, %arg4: memref<1x64xf32, #tpu.memory_space<vmem>>, %arg5: memref<8x32xf32, #tpu.memory_space<vmem>>, %arg6: memref<8x1xf32, #tpu.memory_space<vmem>>, %arg7: memref<8x64xf32, #tpu.memory_space<vmem>>) attributes {dimension_semantics = [#tpu.dimension_semantics<parallel>], iteration_bounds = array<i64: 2>, scalar_prefetch = 0 : i64, scratch_operands = 0 : i64, tpu.core_type = #tpu.core_type<tc>, window_params = [{transform_indices = @transform_0, window_bounds = array<i64: 8, 4096>}, {pipeline_mode = #tpu.pipeline_mode<synchronous>, transform_indices = @transform_1, window_bounds = array<i64: 4096, 64>}, {pipeline_mode = #tpu.pipeline_mode<synchronous>, transform_indices = @transform_2, window_bounds = array<i64: 32, 64>}, {pipeline_mode = #tpu.pipeline_mode<synchronous>, transform_indices = @transform_3, window_bounds = array<i64: 1, 64>}, {transform_indices = @transform_4, window_bounds = array<i64: 8, 32>}, {transform_indices = @transform_5, window_bounds = array<i64: 8, 1>}, {transform_indices = @transform_6, window_bounds = array<i64: 8, 64>}]} {
    %c0 = arith.constant 0 : index
    %c0_0 = arith.constant 0 : index
    %0 = vector.load %arg1[%c0, %c0_0] : memref<8x4096xf32, #tpu.memory_space<vmem>>, vector<8x4096xf32>
    %c0_1 = arith.constant 0 : index
    %c0_2 = arith.constant 0 : index
    %1 = vector.load %arg2[%c0_1, %c0_2] : memref<4096x64xf32, #tpu.memory_space<vmem>>, vector<4096x64xf32>
    %cst = arith.constant dense<0.000000e+00> : vector<8x64xf32>
    %2 = tpu.matmul %0, %1, %cst {dimension_numbers = #tpu.dot_dimension_numbers<[1], [0], [0], [1], [0, 0, 1, 1], [], []>} : vector<8x4096xf32>, vector<4096x64xf32>, vector<8x64xf32> -> vector<8x64xf32>
    %c0_3 = arith.constant 0 : index
    %c0_4 = arith.constant 0 : index
    %3 = vector.load %arg5[%c0_3, %c0_4] : memref<8x32xf32, #tpu.memory_space<vmem>>, vector<8x32xf32>
    %c0_5 = arith.constant 0 : index
    %c0_6 = arith.constant 0 : index
    %4 = vector.load %arg3[%c0_5, %c0_6] : memref<32x64xf32, #tpu.memory_space<vmem>>, vector<32x64xf32>
    %cst_7 = arith.constant dense<0.000000e+00> : vector<8x64xf32>
    %5 = tpu.matmul %3, %4, %cst_7 {dimension_numbers = #tpu.dot_dimension_numbers<[1], [0], [0], [1], [0, 0, 1, 1], [], []>} : vector<8x32xf32>, vector<32x64xf32>, vector<8x64xf32> -> vector<8x64xf32>
    %c0_8 = arith.constant 0 : index
    %c0_9 = arith.constant 0 : index
    %6 = vector.load %arg6[%c0_8, %c0_9] : memref<8x1xf32, #tpu.memory_space<vmem>>, vector<8x1xf32>
    %7 = arith.addf %2, %5 : vector<8x64xf32>
    %c0_10 = arith.constant 0 : index
    %c0_11 = arith.constant 0 : index
    %8 = vector.load %arg4[%c0_10, %c0_11] : memref<1x64xf32, #tpu.memory_space<vmem>>, vector<1x64xf32>
    %9 = vector.broadcast %8 : vector<1x64xf32> to vector<8x64xf32>
    %10 = arith.addf %7, %9 : vector<8x64xf32>
    %11 = vector.broadcast %6 : vector<8x1xf32> to vector<8x64xf32>
    %12 = arith.mulf %10, %11 : vector<8x64xf32>
    %c0_12 = arith.constant 0 : index
    %c0_13 = arith.constant 0 : index
    %13 = vector.load %arg7[%c0_12, %c0_13] : memref<8x64xf32, #tpu.memory_space<vmem>>, vector<8x64xf32>
    tpu.vector_store %arg7[%c0_12, %c0_13], %12 {strides = array<i32>} : memref<8x64xf32, #tpu.memory_space<vmem>>, vector<8x64xf32>,
    return
  }
  func.func @transform_0(%arg0: i32) -> (i32, i32) {
    %c0_i32 = arith.constant 0 : i32
    %c0_i32_0 = arith.constant 0 : i32
    return %arg0, %c0_i32 : i32, i32
  }
  func.func @transform_1(%arg0: i32) -> (i32, i32) {
    %c0_i32 = arith.constant 0 : i32
    %c0_i32_0 = arith.constant 0 : i32
    %c0_i32_1 = arith.constant 0 : i32
    return %c0_i32, %c0_i32_0 : i32, i32
  }
  func.func @transform_2(%arg0: i32) -> (i32, i32) {
    %c0_i32 = arith.constant 0 : i32
    %c0_i32_0 = arith.constant 0 : i32
    %c0_i32_1 = arith.constant 0 : i32
    return %c0_i32, %c0_i32_0 : i32, i32
  }
  func.func @transform_3(%arg0: i32) -> (i32, i32) {
    %c0_i32 = arith.constant 0 : i32
    %c0_i32_0 = arith.constant 0 : i32
    %c0_i32_1 = arith.constant 0 : i32
    return %c0_i32, %c0_i32_0 : i32, i32
  }
  func.func @transform_4(%arg0: i32) -> (i32, i32) {
    %c0_i32 = arith.constant 0 : i32
    %c0_i32_0 = arith.constant 0 : i32
    return %arg0, %c0_i32 : i32, i32
  }
  func.func @transform_5(%arg0: i32) -> (i32, i32) {
    %c0_i32 = arith.constant 0 : i32
    %c0_i32_0 = arith.constant 0 : i32
    return %arg0, %c0_i32 : i32, i32
  }
  func.func @transform_6(%arg0: i32) -> (i32, i32) {
    %c0_i32 = arith.constant 0 : i32
    %c0_i32_0 = arith.constant 0 : i32
    return %arg0, %c0_i32 : i32, i32
  }
}

</mosaic_0001>

<llo_original>
// kernel: tpu_custom_call.1
$region0: #{tpu_custom_call.1}
  #allocation0 [shape = 'u32[]', space=smem, size = 0x4, offset = 0x4, fixed_abs, tag = 'smem constant byte address 0x4 - core index']
  #allocation1 [shape = 'u32[72,128]{1,0:T(1,128)}', space=vmem, size = 0x9000, scoped, tag = 'internal scratch']
  %s0 = inlined_call_operand.vmem [shape: f32[16,4096], index: 0, kind: input, shape index: {}]
  %s1 = inlined_call_operand.vmem [shape: f32[4096,64], index: 1, kind: input, shape index: {}]
  %s2 = inlined_call_operand.vmem [shape: f32[32,64], index: 2, kind: input, shape index: {}]
  %s3 = inlined_call_operand.vmem [shape: f32[1,64], index: 3, kind: input, shape index: {}]
  %s4 = inlined_call_operand.vmem [shape: f32[16,32], index: 4, kind: input, shape index: {}]
  %s5 = inlined_call_operand.vmem [shape: f32[16,1], index: 5, kind: input, shape index: {}]
  %s6 = inlined_call_operand.hbm [shape: f32[16,64], index: 6, kind: output, shape index: {}]
  %s7 = sld [smem:[#allocation0]]
  $region57: #{tpu_custom_call.1} parent=0
    _
  %s9 = ssub.s32 1, %s7
  %s10 = scalar_select 0, %s9, %s7
  $region1: #{tpu_custom_call.1} parent=0
    #allocation2 [shape = 'u8[8192]{0}', space=vmem, size = 0x2000, scoped, tag = 'output window, operand 0']
    #allocation3 [shape = 's32[2]{0}', space=sflag, size = 0x8, scoped, tag = 'scoped memory for tpu_custom_call.1']
    %11 = vsyncpa [#allocation3], 0
    %s12 = scalar_lea.sflag [#allocation3], 1
    %13 = vsyncpa %s12, 0
    loop: start=0, step=1, limit=4
    $region2: #{tpu_custom_call.1} parent=1 // loop_pre_header
      _
    $region3: #{tpu_custom_call.1} parent=1 // loop_header
      %s15 = sphi 0, %s19
      %p16 = scmp.ge.s32.totalorder %s15, 4
      %s25 = sphi 0, %s27
      %s28 = sphi 0, %s25
      %s29 = sphi 0, %s28
      %s45 = sphi 0, %s29
      %s49 = sphi 0, %s49
      %s51 = sphi 0, %s49
      %s52 = sphi 0, %s51
      %s66 = sphi 0, %s52
      %s70 = sphi 0, %s70
      %s72 = sphi 0, %s70
      %s73 = sphi 0, %s72
      %s87 = sphi 0, %s73
      %s91 = sphi 0, %s91
      %s93 = sphi 0, %s91
      %s94 = sphi 0, %s93
      %s108 = sphi 0, %s94
      %s114 = sphi 0, %s116
      %s117 = sphi 0, %s114
      %s118 = sphi 0, %s117
      %s134 = sphi 0, %s118
      %s140 = sphi 0, %s142
      %s143 = sphi 0, %s140
      %s144 = sphi 0, %s143
      %s160 = sphi 0, %s144
      %s166 = sphi 0, %s168
      %s169 = sphi 0, %s166
      %s170 = sphi 0, %s169
      %s186 = sphi 0, %s170
    $region4: #{tpu_custom_call.1} parent=1 // loop_header_branch
      %18 = sbr.rel (%p16) target = $region8
    $region5: #{tpu_custom_call.1} parent=1 // loop_body
      %s20 = ssub.s32 %s15, 1
      %s21 = ssub.s32 %s15, 2
      %s22 = sadd.s32 %s15, 1
      %s23 = ssub.s32 %s15, %s22
      %p24 = scmp.eq.s32.totalorder %s23, 0
      %s26 = sadd.s32 %s25, 1
      %s27 = scalar_select %p24, %s25, %s26
      %p30 = pneg %p24
      %p31 = scmp.eq.s32.totalorder %s15, 1
      %p32 = por %p30, %p31
      %p33 = scmp.ne.s32.totalorder %s25, %s28
      %p34 = scmp.eq.s32.totalorder %s15, 0
      %p35 = por %p33, %p34
      %p36 = scmp.ne.s32.totalorder %s25, %s28
      %p37 = scmp.eq.s32.totalorder %s20, 1
      %p38 = por %p36, %p37
      %p39 = scmp.ne.s32.totalorder %s28, %s29
      %p40 = scmp.eq.s32.totalorder %s20, 0
      %p41 = por %p39, %p40
      %p42 = scmp.ne.s32.totalorder %s28, %s29
      %p43 = scmp.eq.s32.totalorder %s21, 1
      %p44 = por %p42, %p43
      %p46 = scmp.ne.s32.totalorder %s29, %s45
      %p47 = scmp.eq.s32.totalorder %s21, 0
      %p48 = por %p46, %p47
      %s50 = sadd.s32 %s49, 1
      %p53 = scmp.eq.s32.totalorder %s15, 1
      %p54 = scmp.ne.s32.totalorder %s49, %s51
      %p55 = scmp.eq.s32.totalorder %s15, 0
      %p56 = por %p54, %p55
      %p57 = scmp.ne.s32.totalorder %s49, %s51
      %p58 = scmp.eq.s32.totalorder %s20, 1
      %p59 = por %p57, %p58
      %p60 = scmp.ne.s32.totalorder %s51, %s52
      %p61 = scmp.eq.s32.totalorder %s20, 0
      %p62 = por %p60, %p61
      %p63 = scmp.ne.s32.totalorder %s51, %s52
      %p64 = scmp.eq.s32.totalorder %s21, 1
      %p65 = por %p63, %p64
      %p67 = scmp.ne.s32.totalorder %s52, %s66
      %p68 = scmp.eq.s32.totalorder %s21, 0
      %p69 = por %p67, %p68
      %s71 = sadd.s32 %s70, 1
      %p74 = scmp.eq.s32.totalorder %s15, 1
      %p75 = scmp.ne.s32.totalorder %s70, %s72
      %p76 = scmp.eq.s32.totalorder %s15, 0
      %p77 = por %p75, %p76
      %p78 = scmp.ne.s32.totalorder %s70, %s72
      %p79 = scmp.eq.s32.totalorder %s20, 1
      %p80 = por %p78, %p79
      %p81 = scmp.ne.s32.totalorder %s72, %s73
      %p82 = scmp.eq.s32.totalorder %s20, 0
      %p83 = por %p81, %p82
      %p84 = scmp.ne.s32.totalorder %s72, %s73
      %p85 = scmp.eq.s32.totalorder %s21, 1
      %p86 = por %p84, %p85
      %p88 = scmp.ne.s32.totalorder %s73, %s87
      %p89 = scmp.eq.s32.totalorder %s21, 0
      %p90 = por %p88, %p89
      %s92 = sadd.s32 %s91, 1
      %p95 = scmp.eq.s32.totalorder %s15, 1
      %p96 = scmp.ne.s32.totalorder %s91, %s93
      %p97 = scmp.eq.s32.totalorder %s15, 0
      %p98 = por %p96, %p97
      %p99 = scmp.ne.s32.totalorder %s91, %s93
      %p100 = scmp.eq.s32.totalorder %s20, 1
      %p101 = por %p99, %p100
      %p102 = scmp.ne.s32.totalorder %s93, %s94
      %p103 = scmp.eq.s32.totalorder %s20, 0
      %p104 = por %p102, %p103
      %p105 = scmp.ne.s32.totalorder %s93, %s94
      %p106 = scmp.eq.s32.totalorder %s21, 1
      %p107 = por %p105, %p106
      %p109 = scmp.ne.s32.totalorder %s94, %s108
      %p110 = scmp.eq.s32.totalorder %s21, 0
      %p111 = por %p109, %p110
      %s112 = ssub.s32 %s15, %s22
      %p113 = scmp.eq.s32.totalorder %s112, 0
      %s115 = sadd.s32 %s114, 1
      %s116 = scalar_select %p113, %s114, %s115
      %p119 = pneg %p113
      %p120 = scmp.eq.s32.totalorder %s15, 1
      %p121 = por %p119, %p120
      %p122 = scmp.ne.s32.totalorder %s114, %s117
      %p123 = scmp.eq.s32.totalorder %s15, 0
      %p124 = por %p122, %p123
      %p125 = scmp.ne.s32.totalorder %s114, %s117
      %p126 = scmp.eq.s32.totalorder %s20, 1
      %p127 = por %p125, %p126
      %p128 = scmp.ne.s32.totalorder %s117, %s118
      %p129 = scmp.eq.s32.totalorder %s20, 0
      %p130 = por %p128, %p129
      %p131 = scmp.ne.s32.totalorder %s117, %s118
      %p132 = scmp.eq.s32.totalorder %s21, 1
      %p133 = por %p131, %p132
      %p135 = scmp.ne.s32.totalorder %s118, %s134
      %p136 = scmp.eq.s32.totalorder %s21, 0
      %p137 = por %p135, %p136
      %s138 = ssub.s32 %s15, %s22
      %p139 = scmp.eq.s32.totalorder %s138, 0
      %s141 = sadd.s32 %s140, 1
      %s142 = scalar_select %p139, %s140, %s141
      %p145 = pneg %p139
      %p146 = scmp.eq.s32.totalorder %s15, 1
      %p147 = por %p145, %p146
      %p148 = scmp.ne.s32.totalorder %s140, %s143
      %p149 = scmp.eq.s32.totalorder %s15, 0
      %p150 = por %p148, %p149
      %p151 = scmp.ne.s32.totalorder %s140, %s143
      %p152 = scmp.eq.s32.totalorder %s20, 1
      %p153 = por %p151, %p152
      %p154 = scmp.ne.s32.totalorder %s143, %s144
      %p155 = scmp.eq.s32.totalorder %s20, 0
      %p156 = por %p154, %p155
      %p157 = scmp.ne.s32.totalorder %s143, %s144
      %p158 = scmp.eq.s32.totalorder %s21, 1
      %p159 = por %p157, %p158
      %p161 = scmp.ne.s32.totalorder %s144, %s160
      %p162 = scmp.eq.s32.totalorder %s21, 0
      %p163 = por %p161, %p162
      %s164 = ssub.s32 %s15, %s22
      %p165 = scmp.eq.s32.totalorder %s164, 0
      %s167 = sadd.s32 %s166, 1
      %s168 = scalar_select %p165, %s166, %s167
      %p171 = pneg %p165
      %p172 = scmp.eq.s32.totalorder %s15, 1
      %p173 = por %p171, %p172
      %p174 = scmp.ne.s32.totalorder %s166, %s169
      %p175 = scmp.eq.s32.totalorder %s15, 0
      %p176 = por %p174, %p175
      %p177 = scmp.ne.s32.totalorder %s166, %s169
      %p178 = scmp.eq.s32.totalorder %s20, 1
      %p179 = por %p177, %p178
      %p180 = scmp.ne.s32.totalorder %s169, %s170
      %p181 = scmp.eq.s32.totalorder %s20, 0
      %p182 = por %p180, %p181
      %p183 = scmp.ne.s32.totalorder %s169, %s170
      %p184 = scmp.eq.s32.totalorder %s21, 1
      %p185 = por %p183, %p184
      %p187 = scmp.ne.s32.totalorder %s170, %s186
      %p188 = scmp.eq.s32.totalorder %s21, 0
      %p189 = por %p187, %p188
      %p190 = scmp.le.s32.totalorder 1, %s15
      %p191 = scmp.lt.s32.totalorder %s15, 3
      %p192 = pnand %p190, %p191
      %p193 = pneg %p192
      // Predicated region
      $region9: #{tpu_custom_call.1} parent=5 // pred_check
        _
      $region10: #{tpu_custom_call.1} parent=5 // pred_check_branch
        %195 = sbr.rel (%p192) target = $region12
      $region11: #{tpu_custom_call.1} parent=5 // pred_region
        %s196 = ssub.s32 %s15, 1
        // Predicated region
        $region13: #{tpu_custom_call.1} parent=11 // pred_check
          %p197 = pneg %p62
        $region14: #{tpu_custom_call.1} parent=11 // pred_check_branch
          %199 = sbr.rel (%p197) target = $region16
        $region15: #{tpu_custom_call.1} parent=11 // pred_region
          _
        $region16: #{tpu_custom_call.1} parent=11 // pred_fallthru
          _
        // Predicated region
        $region17: #{tpu_custom_call.1} parent=11 // pred_check
          %p200 = pneg %p83
        $region18: #{tpu_custom_call.1} parent=11 // pred_check_branch
          %202 = sbr.rel (%p200) target = $region20
        $region19: #{tpu_custom_call.1} parent=11 // pred_region
          _
        $region20: #{tpu_custom_call.1} parent=11 // pred_fallthru
          _
        // Predicated region
        $region21: #{tpu_custom_call.1} parent=11 // pred_check
          %p203 = pneg %p104
        $region22: #{tpu_custom_call.1} parent=11 // pred_check_branch
          %205 = sbr.rel (%p203) target = $region24
        $region23: #{tpu_custom_call.1} parent=11 // pred_region
          _
        $region24: #{tpu_custom_call.1} parent=11 // pred_fallthru
          _
      $region12: #{tpu_custom_call.1} parent=5 // pred_fallthru
        _
      %p206 = scmp.lt.s32.totalorder %s15, 2
      // Predicated region
      $region25: #{tpu_custom_call.1} parent=5 // pred_check
        %p207 = pneg %p206
      $region26: #{tpu_custom_call.1} parent=5 // pred_check_branch
        %209 = sbr.rel (%p207) target = $region28
      $region27: #{tpu_custom_call.1} parent=5 // pred_region
        // Predicated region
        $region29: #{tpu_custom_call.1} parent=27 // pred_check
          %p210 = pneg %p35
        $region30: #{tpu_custom_call.1} parent=27 // pred_check_branch
          %212 = sbr.rel (%p210) target = $region32
        $region31: #{tpu_custom_call.1} parent=27 // pred_region
          %p213 = scmp.lt.s32.totalorder %s15, 1
          %s214 = scalar_select %p213, %s15, 1
          %s215 = smul.addr %s214, 32
          %s216 = smul.addr %s215, 8
          %s217 = scalar_lea.vmem %s0, %s216
        $region32: #{tpu_custom_call.1} parent=27 // pred_fallthru
          _
        // Predicated region
        $region33: #{tpu_custom_call.1} parent=27 // pred_check
          %p218 = pneg %p124
        $region34: #{tpu_custom_call.1} parent=27 // pred_check_branch
          %220 = sbr.rel (%p218) target = $region36
        $region35: #{tpu_custom_call.1} parent=27 // pred_region
          %p221 = scmp.lt.s32.totalorder %s15, 1
          %s222 = scalar_select %p221, %s15, 1
          %s223 = smul.addr %s222, 8
          %s224 = scalar_lea.vmem %s4, %s223
        $region36: #{tpu_custom_call.1} parent=27 // pred_fallthru
          _
        // Predicated region
        $region37: #{tpu_custom_call.1} parent=27 // pred_check
          %p225 = pneg %p150
        $region38: #{tpu_custom_call.1} parent=27 // pred_check_branch
          %227 = sbr.rel (%p225) target = $region40
        $region39: #{tpu_custom_call.1} parent=27 // pred_region
          %p228 = scmp.lt.s32.totalorder %s15, 1
          %s229 = scalar_select %p228, %s15, 1
          %s230 = smul.addr %s229, 8
          %s231 = scalar_lea.vmem %s5, %s230
        $region40: #{tpu_custom_call.1} parent=27 // pred_fallthru
          _
      $region28: #{tpu_custom_call.1} parent=5 // pred_fallthru
        _
      %p232 = scmp.le.s32.totalorder 1, %s15
      %p233 = scmp.lt.s32.totalorder %s15, 3
      %p234 = pnand %p232, %p233
      %p235 = pneg %p234
      // Predicated region
      $region41: #{tpu_custom_call.1} parent=5 // pred_check
        _
      $region42: #{tpu_custom_call.1} parent=5 // pred_check_branch
        %237 = sbr.rel (%p234) target = $region44
      $region43: #{tpu_custom_call.1} parent=5 // pred_region
        %s238 = ssub.s32 %s15, 1
        %p239 = scmp.lt.s32.totalorder %s20, 1
        %s240 = scalar_select %p239, %s20, 1
        %s241 = smul.addr %s240, 32
        %s242 = smul.addr %s241, 8
        %s243 = scalar_lea.vmem %s0, %s242
        %p244 = pneg %p41
        %p245 = pneg %p38
        %p246 = pneg %p62
        %p247 = pneg %p59
        %p248 = pneg %p83
        %p249 = pneg %p80
        %p250 = pneg %p104
        %p251 = pneg %p101
        %p252 = scmp.lt.s32.totalorder %s20, 1
        %s253 = scalar_select %p252, %s20, 1
        %s254 = smul.addr %s253, 8
        %s255 = scalar_lea.vmem %s4, %s254
        %p256 = pneg %p130
        %p257 = pneg %p127
        %p258 = scmp.lt.s32.totalorder %s20, 1
        %s259 = scalar_select %p258, %s20, 1
        %s260 = smul.addr %s259, 8
        %s261 = scalar_lea.vmem %s5, %s260
        %p262 = pneg %p156
        %p263 = pneg %p153
        %p264 = pneg %p182
        %p265 = pneg %p179
        %s266 = sand.u32 %s169, 1
        %s267 = scalar_lea.sflag [#allocation3], %s266
        %s268 = sand.u32 %s169, 1
        %s269 = smul.addr %s268, 8
        %s270 = scalar_lea.vmem [#allocation2], %s269
        %p271 = scmp.lt.s32.totalorder %s20, 1
        %s272 = scalar_select %p271, %s20, 1
        %s273 = smul.addr %s272, 32
        %s274 = smul.addr %s273, 8
        %s275 = scalar_lea.vmem %s0, %s274
        %p276 = scmp.lt.s32.totalorder %s20, 1
        %s277 = scalar_select %p276, %s20, 1
        %s278 = smul.addr %s277, 8
        %s279 = scalar_lea.vmem %s4, %s278
        %p280 = scmp.lt.s32.totalorder %s20, 1
        %s281 = scalar_select %p280, %s20, 1
        %s282 = smul.addr %s281, 8
        %s283 = scalar_lea.vmem %s5, %s282
        %v284 = vld [vmem:[%s275] sm:$0xff]
        %v285 = vld [vmem:[%s275 + $0x8] sm:$0xff]
        %v286 = vld [vmem:[%s275 + $0x10] sm:$0xff]
        %v287 = vld [vmem:[%s275 + $0x18] sm:$0xff]
        %v288 = vld [vmem:[%s275 + $0x20] sm:$0xff]
        %v289 = vld [vmem:[%s275 + $0x28] sm:$0xff]
        %v290 = vld [vmem:[%s275 + $0x30] sm:$0xff]
        %v291 = vld [vmem:[%s275 + $0x38] sm:$0xff]
        %v292 = vld [vmem:[%s275 + $0x40] sm:$0xff]
        %v293 = vld [vmem:[%s275 + $0x48] sm:$0xff]
        %v294 = vld [vmem:[%s275 + $0x50] sm:$0xff]
        %v295 = vld [vmem:[%s275 + $0x58] sm:$0xff]
        %v296 = vld [vmem:[%s275 + $0x60] sm:$0xff]
        %v297 = vld [vmem:[%s275 + $0x68] sm:$0xff]
        %v298 = vld [vmem:[%s275 + $0x70] sm:$0xff]
        %v299 = vld [vmem:[%s275 + $0x78] sm:$0xff]
        %v300 = vld [vmem:[%s275 + $0x80] sm:$0xff]
        %v301 = vld [vmem:[%s275 + $0x88] sm:$0xff]
        %v302 = vld [vmem:[%s275 + $0x90] sm:$0xff]
        %v303 = vld [vmem:[%s275 + $0x98] sm:$0xff]
        %v304 = vld [vmem:[%s275 + $0xa0] sm:$0xff]
        %v305 = vld [vmem:[%s275 + $0xa8] sm:$0xff]
        %v306 = vld [vmem:[%s275 + $0xb0] sm:$0xff]
        %v307 = vld [vmem:[%s275 + $0xb8] sm:$0xff]
        %v308 = vld [vmem:[%s275 + $0xc0] sm:$0xff]
        %v309 = vld [vmem:[%s275 + $0xc8] sm:$0xff]
        %v310 = vld [vmem:[%s275 + $0xd0] sm:$0xff]
        %v311 = vld [vmem:[%s275 + $0xd8] sm:$0xff]
        %v312 = vld [vmem:[%s275 + $0xe0] sm:$0xff]
        %v313 = vld [vmem:[%s275 + $0xe8] sm:$0xff]
        %v314 = vld [vmem:[%s275 + $0xf0] sm:$0xff]
        %v315 = vld [vmem:[%s275 + $0xf8] sm:$0xff]
        %v316 = vld [vmem:[%s1] sm:$0xff]
        %v317 = vld [vmem:[%s1 + $0x8] sm:$0xff]
        %v318 = vld [vmem:[%s1 + $0x10] sm:$0xff]
        %v319 = vld [vmem:[%s1 + $0x18] sm:$0xff]
        %v320 = vld [vmem:[%s1 + $0x20] sm:$0xff]
        %v321 = vld [vmem:[%s1 + $0x28] sm:$0xff]
        %v322 = vld [vmem:[%s1 + $0x30] sm:$0xff]
        %v323 = vld [vmem:[%s1 + $0x38] sm:$0xff]
        %v324 = vld [vmem:[%s1 + $0x40] sm:$0xff]
        %v325 = vld [vmem:[%s1 + $0x48] sm:$0xff]
        %v326 = vld [vmem:[%s1 + $0x50] sm:$0xff]
        %v327 = vld [vmem:[%s1 + $0x58] sm:$0xff]
        %v328 = vld [vmem:[%s1 + $0x60] sm:$0xff]
        %v329 = vld [vmem:[%s1 + $0x68] sm:$0xff]
        %v330 = vld [vmem:[%s1 + $0x70] sm:$0xff]
        %v331 = vld [vmem:[%s1 + $0x78] sm:$0xff]
        %v332 = vld [vmem:[%s1 + $0x80] sm:$0xff]
        %v333 = vld [vmem:[%s1 + $0x88] sm:$0xff]
        %v334 = vld [vmem:[%s1 + $0x90] sm:$0xff]
        %v335 = vld [vmem:[%s1 + $0x98] sm:$0xff]
        %v336 = vld [vmem:[%s1 + $0xa0] sm:$0xff]
        %v337 = vld [vmem:[%s1 + $0xa8] sm:$0xff]
        %v338 = vld [vmem:[%s1 + $0xb0] sm:$0xff]
        %v339 = vld [vmem:[%s1 + $0xb8] sm:$0xff]
        %v340 = vld [vmem:[%s1 + $0xc0] sm:$0xff]
        %v341 = vld [vmem:[%s1 + $0xc8] sm:$0xff]
        %v342 = vld [vmem:[%s1 + $0xd0] sm:$0xff]
        %v343 = vld [vmem:[%s1 + $0xd8] sm:$0xff]
        %v344 = vld [vmem:[%s1 + $0xe0] sm:$0xff]
        %v345 = vld [vmem:[%s1 + $0xe8] sm:$0xff]
        %v346 = vld [vmem:[%s1 + $0xf0] sm:$0xff]
        %v347 = vld [vmem:[%s1 + $0xf8] sm:$0xff]
        %v348 = vld [vmem:[%s1 + $0x100] sm:$0xff]
        %v349 = vld [vmem:[%s1 + $0x108] sm:$0xff]
        %v350 = vld [vmem:[%s1 + $0x110] sm:$0xff]
        %v351 = vld [vmem:[%s1 + $0x118] sm:$0xff]
        %v352 = vld [vmem:[%s1 + $0x120] sm:$0xff]
        %v353 = vld [vmem:[%s1 + $0x128] sm:$0xff]
        %v354 = vld [vmem:[%s1 + $0x130] sm:$0xff]
        %v355 = vld [vmem:[%s1 + $0x138] sm:$0xff]
        %v356 = vld [vmem:[%s1 + $0x140] sm:$0xff]
        %v357 = vld [vmem:[%s1 + $0x148] sm:$0xff]
        %v358 = vld [vmem:[%s1 + $0x150] sm:$0xff]
        %v359 = vld [vmem:[%s1 + $0x158] sm:$0xff]
        %v360 = vld [vmem:[%s1 + $0x160] sm:$0xff]
        %v361 = vld [vmem:[%s1 + $0x168] sm:$0xff]
        %v362 = vld [vmem:[%s1 + $0x170] sm:$0xff]
        %v363 = vld [vmem:[%s1 + $0x178] sm:$0xff]
        %v364 = vld [vmem:[%s1 + $0x180] sm:$0xff]
        %v365 = vld [vmem:[%s1 + $0x188] sm:$0xff]
        %v366 = vld [vmem:[%s1 + $0x190] sm:$0xff]
        %v367 = vld [vmem:[%s1 + $0x198] sm:$0xff]
        %v368 = vld [vmem:[%s1 + $0x1a0] sm:$0xff]
        %v369 = vld [vmem:[%s1 + $0x1a8] sm:$0xff]
        %v370 = vld [vmem:[%s1 + $0x1b0] sm:$0xff]
        %v371 = vld [vmem:[%s1 + $0x1b8] sm:$0xff]
        %v372 = vld [vmem:[%s1 + $0x1c0] sm:$0xff]
        %v373 = vld [vmem:[%s1 + $0x1c8] sm:$0xff]
        %v374 = vld [vmem:[%s1 + $0x1d0] sm:$0xff]
        %v375 = vld [vmem:[%s1 + $0x1d8] sm:$0xff]
        %v376 = vld [vmem:[%s1 + $0x1e0] sm:$0xff]
        %v377 = vld [vmem:[%s1 + $0x1e8] sm:$0xff]
        %v378 = vld [vmem:[%s1 + $0x1f0] sm:$0xff]
        %v379 = vld [vmem:[%s1 + $0x1f8] sm:$0xff]
        %v380 = vld [vmem:[%s1 + $0x200] sm:$0xff]
        %v381 = vld [vmem:[%s1 + $0x208] sm:$0xff]
        %v382 = vld [vmem:[%s1 + $0x210] sm:$0xff]
        %v383 = vld [vmem:[%s1 + $0x218] sm:$0xff]
        %v384 = vld [vmem:[%s1 + $0x220] sm:$0xff]
        %v385 = vld [vmem:[%s1 + $0x228] sm:$0xff]
        %v386 = vld [vmem:[%s1 + $0x230] sm:$0xff]
        %v387 = vld [vmem:[%s1 + $0x238] sm:$0xff]
        %v388 = vld [vmem:[%s1 + $0x240] sm:$0xff]
        %v389 = vld [vmem:[%s1 + $0x248] sm:$0xff]
        %v390 = vld [vmem:[%s1 + $0x250] sm:$0xff]
        %v391 = vld [vmem:[%s1 + $0x258] sm:$0xff]
        %v392 = vld [vmem:[%s1 + $0x260] sm:$0xff]
        %v393 = vld [vmem:[%s1 + $0x268] sm:$0xff]
        %v394 = vld [vmem:[%s1 + $0x270] sm:$0xff]
        %v395 = vld [vmem:[%s1 + $0x278] sm:$0xff]
        %v396 = vld [vmem:[%s1 + $0x280] sm:$0xff]
        %v397 = vld [vmem:[%s1 + $0x288] sm:$0xff]
        %v398 = vld [vmem:[%s1 + $0x290] sm:$0xff]
        %v399 = vld [vmem:[%s1 + $0x298] sm:$0xff]
        %v400 = vld [vmem:[%s1 + $0x2a0] sm:$0xff]
        %v401 = vld [vmem:[%s1 + $0x2a8] sm:$0xff]
        %v402 = vld [vmem:[%s1 + $0x2b0] sm:$0xff]
        %v403 = vld [vmem:[%s1 + $0x2b8] sm:$0xff]
        %v404 = vld [vmem:[%s1 + $0x2c0] sm:$0xff]
        %v405 = vld [vmem:[%s1 + $0x2c8] sm:$0xff]
        %v406 = vld [vmem:[%s1 + $0x2d0] sm:$0xff]
        %v407 = vld [vmem:[%s1 + $0x2d8] sm:$0xff]
        %v408 = vld [vmem:[%s1 + $0x2e0] sm:$0xff]
        %v409 = vld [vmem:[%s1 + $0x2e8] sm:$0xff]
        %v410 = vld [vmem:[%s1 + $0x2f0] sm:$0xff]
        %v411 = vld [vmem:[%s1 + $0x2f8] sm:$0xff]
        %v412 = vld [vmem:[%s1 + $0x300] sm:$0xff]
        %v413 = vld [vmem:[%s1 + $0x308] sm:$0xff]
        %v414 = vld [vmem:[%s1 + $0x310] sm:$0xff]
        %v415 = vld [vmem:[%s1 + $0x318] sm:$0xff]
        %v416 = vld [vmem:[%s1 + $0x320] sm:$0xff]
        %v417 = vld [vmem:[%s1 + $0x328] sm:$0xff]
        %v418 = vld [vmem:[%s1 + $0x330] sm:$0xff]
        %v419 = vld [vmem:[%s1 + $0x338] sm:$0xff]
        %v420 = vld [vmem:[%s1 + $0x340] sm:$0xff]
        %v421 = vld [vmem:[%s1 + $0x348] sm:$0xff]
        %v422 = vld [vmem:[%s1 + $0x350] sm:$0xff]
        %v423 = vld [vmem:[%s1 + $0x358] sm:$0xff]
        %v424 = vld [vmem:[%s1 + $0x360] sm:$0xff]
        %v425 = vld [vmem:[%s1 + $0x368] sm:$0xff]
        %v426 = vld [vmem:[%s1 + $0x370] sm:$0xff]
        %v427 = vld [vmem:[%s1 + $0x378] sm:$0xff]
        %v428 = vld [vmem:[%s1 + $0x380] sm:$0xff]
        %v429 = vld [vmem:[%s1 + $0x388] sm:$0xff]
        %v430 = vld [vmem:[%s1 + $0x390] sm:$0xff]
        %v431 = vld [vmem:[%s1 + $0x398] sm:$0xff]
        %v432 = vld [vmem:[%s1 + $0x3a0] sm:$0xff]
        %v433 = vld [vmem:[%s1 + $0x3a8] sm:$0xff]
        %v434 = vld [vmem:[%s1 + $0x3b0] sm:$0xff]
        %v435 = vld [vmem:[%s1 + $0x3b8] sm:$0xff]
        %v436 = vld [vmem:[%s1 + $0x3c0] sm:$0xff]
        %v437 = vld [vmem:[%s1 + $0x3c8] sm:$0xff]
        %v438 = vld [vmem:[%s1 + $0x3d0] sm:$0xff]
        %v439 = vld [vmem:[%s1 + $0x3d8] sm:$0xff]
        %v440 = vld [vmem:[%s1 + $0x3e0] sm:$0xff]
        %v441 = vld [vmem:[%s1 + $0x3e8] sm:$0xff]
        %v442 = vld [vmem:[%s1 + $0x3f0] sm:$0xff]
        %v443 = vld [vmem:[%s1 + $0x3f8] sm:$0xff]
        %v444 = vld [vmem:[%s1 + $0x400] sm:$0xff]
        %v445 = vld [vmem:[%s1 + $0x408] sm:$0xff]
        %v446 = vld [vmem:[%s1 + $0x410] sm:$0xff]
        %v447 = vld [vmem:[%s1 + $0x418] sm:$0xff]
        %v448 = vld [vmem:[%s1 + $0x420] sm:$0xff]
        %v449 = vld [vmem:[%s1 + $0x428] sm:$0xff]
        %v450 = vld [vmem:[%s1 + $0x430] sm:$0xff]
        %v451 = vld [vmem:[%s1 + $0x438] sm:$0xff]
        %v452 = vld [vmem:[%s1 + $0x440] sm:$0xff]
        %v453 = vld [vmem:[%s1 + $0x448] sm:$0xff]
        %v454 = vld [vmem:[%s1 + $0x450] sm:$0xff]
        %v455 = vld [vmem:[%s1 + $0x458] sm:$0xff]
        %v456 = vld [vmem:[%s1 + $0x460] sm:$0xff]
        %v457 = vld [vmem:[%s1 + $0x468] sm:$0xff]
        %v458 = vld [vmem:[%s1 + $0x470] sm:$0xff]
        %v459 = vld [vmem:[%s1 + $0x478] sm:$0xff]
        %v460 = vld [vmem:[%s1 + $0x480] sm:$0xff]
        %v461 = vld [vmem:[%s1 + $0x488] sm:$0xff]
        %v462 = vld [vmem:[%s1 + $0x490] sm:$0xff]
        %v463 = vld [vmem:[%s1 + $0x498] sm:$0xff]
        %v464 = vld [vmem:[%s1 + $0x4a0] sm:$0xff]
        %v465 = vld [vmem:[%s1 + $0x4a8] sm:$0xff]
        %v466 = vld [vmem:[%s1 + $0x4b0] sm:$0xff]
        %v467 = vld [vmem:[%s1 + $0x4b8] sm:$0xff]
        %v468 = vld [vmem:[%s1 + $0x4c0] sm:$0xff]
        %v469 = vld [vmem:[%s1 + $0x4c8] sm:$0xff]
        %v470 = vld [vmem:[%s1 + $0x4d0] sm:$0xff]
        %v471 = vld [vmem:[%s1 + $0x4d8] sm:$0xff]
        %v472 = vld [vmem:[%s1 + $0x4e0] sm:$0xff]
        %v473 = vld [vmem:[%s1 + $0x4e8] sm:$0xff]
        %v474 = vld [vmem:[%s1 + $0x4f0] sm:$0xff]
        %v475 = vld [vmem:[%s1 + $0x4f8] sm:$0xff]
        %v476 = vld [vmem:[%s1 + $0x500] sm:$0xff]
        %v477 = vld [vmem:[%s1 + $0x508] sm:$0xff]
        %v478 = vld [vmem:[%s1 + $0x510] sm:$0xff]
        %v479 = vld [vmem:[%s1 + $0x518] sm:$0xff]
        %v480 = vld [vmem:[%s1 + $0x520] sm:$0xff]
        %v481 = vld [vmem:[%s1 + $0x528] sm:$0xff]
        %v482 = vld [vmem:[%s1 + $0x530] sm:$0xff]
        %v483 = vld [vmem:[%s1 + $0x538] sm:$0xff]
        %v484 = vld [vmem:[%s1 + $0x540] sm:$0xff]
        %v485 = vld [vmem:[%s1 + $0x548] sm:$0xff]
        %v486 = vld [vmem:[%s1 + $0x550] sm:$0xff]
        %v487 = vld [vmem:[%s1 + $0x558] sm:$0xff]
        %v488 = vld [vmem:[%s1 + $0x560] sm:$0xff]
        %v489 = vld [vmem:[%s1 + $0x568] sm:$0xff]
        %v490 = vld [vmem:[%s1 + $0x570] sm:$0xff]
        %v491 = vld [vmem:[%s1 + $0x578] sm:$0xff]
        %v492 = vld [vmem:[%s1 + $0x580] sm:$0xff]
        %v493 = vld [vmem:[%s1 + $0x588] sm:$0xff]
        %v494 = vld [vmem:[%s1 + $0x590] sm:$0xff]
        %v495 = vld [vmem:[%s1 + $0x598] sm:$0xff]
        %v496 = vld [vmem:[%s1 + $0x5a0] sm:$0xff]
        %v497 = vld [vmem:[%s1 + $0x5a8] sm:$0xff]
        %v498 = vld [vmem:[%s1 + $0x5b0] sm:$0xff]
        %v499 = vld [vmem:[%s1 + $0x5b8] sm:$0xff]
        %v500 = vld [vmem:[%s1 + $0x5c0] sm:$0xff]
        %v501 = vld [vmem:[%s1 + $0x5c8] sm:$0xff]
        %v502 = vld [vmem:[%s1 + $0x5d0] sm:$0xff]
        %v503 = vld [vmem:[%s1 + $0x5d8] sm:$0xff]
        %v504 = vld [vmem:[%s1 + $0x5e0] sm:$0xff]
        %v505 = vld [vmem:[%s1 + $0x5e8] sm:$0xff]
        %v506 = vld [vmem:[%s1 + $0x5f0] sm:$0xff]
        %v507 = vld [vmem:[%s1 + $0x5f8] sm:$0xff]
        %v508 = vld [vmem:[%s1 + $0x600] sm:$0xff]
        %v509 = vld [vmem:[%s1 + $0x608] sm:$0xff]
        %v510 = vld [vmem:[%s1 + $0x610] sm:$0xff]
        %v511 = vld [vmem:[%s1 + $0x618] sm:$0xff]
        %v512 = vld [vmem:[%s1 + $0x620] sm:$0xff]
        %v513 = vld [vmem:[%s1 + $0x628] sm:$0xff]
        %v514 = vld [vmem:[%s1 + $0x630] sm:$0xff]
        %v515 = vld [vmem:[%s1 + $0x638] sm:$0xff]
        %v516 = vld [vmem:[%s1 + $0x640] sm:$0xff]
        %v517 = vld [vmem:[%s1 + $0x648] sm:$0xff]
        %v518 = vld [vmem:[%s1 + $0x650] sm:$0xff]
        %v519 = vld [vmem:[%s1 + $0x658] sm:$0xff]
        %v520 = vld [vmem:[%s1 + $0x660] sm:$0xff]
        %v521 = vld [vmem:[%s1 + $0x668] sm:$0xff]
        %v522 = vld [vmem:[%s1 + $0x670] sm:$0xff]
        %v523 = vld [vmem:[%s1 + $0x678] sm:$0xff]
        %v524 = vld [vmem:[%s1 + $0x680] sm:$0xff]
        %v525 = vld [vmem:[%s1 + $0x688] sm:$0xff]
        %v526 = vld [vmem:[%s1 + $0x690] sm:$0xff]
        %v527 = vld [vmem:[%s1 + $0x698] sm:$0xff]
        %v528 = vld [vmem:[%s1 + $0x6a0] sm:$0xff]
        %v529 = vld [vmem:[%s1 + $0x6a8] sm:$0xff]
        %v530 = vld [vmem:[%s1 + $0x6b0] sm:$0xff]
        %v531 = vld [vmem:[%s1 + $0x6b8] sm:$0xff]
        %v532 = vld [vmem:[%s1 + $0x6c0] sm:$0xff]
        %v533 = vld [vmem:[%s1 + $0x6c8] sm:$0xff]
        %v534 = vld [vmem:[%s1 + $0x6d0] sm:$0xff]
        %v535 = vld [vmem:[%s1 + $0x6d8] sm:$0xff]
        %v536 = vld [vmem:[%s1 + $0x6e0] sm:$0xff]
        %v537 = vld [vmem:[%s1 + $0x6e8] sm:$0xff]
        %v538 = vld [vmem:[%s1 + $0x6f0] sm:$0xff]
        %v539 = vld [vmem:[%s1 + $0x6f8] sm:$0xff]
        %v540 = vld [vmem:[%s1 + $0x700] sm:$0xff]
        %v541 = vld [vmem:[%s1 + $0x708] sm:$0xff]
        %v542 = vld [vmem:[%s1 + $0x710] sm:$0xff]
        %v543 = vld [vmem:[%s1 + $0x718] sm:$0xff]
        %v544 = vld [vmem:[%s1 + $0x720] sm:$0xff]
        %v545 = vld [vmem:[%s1 + $0x728] sm:$0xff]
        %v546 = vld [vmem:[%s1 + $0x730] sm:$0xff]
        %v547 = vld [vmem:[%s1 + $0x738] sm:$0xff]
        %v548 = vld [vmem:[%s1 + $0x740] sm:$0xff]
        %v549 = vld [vmem:[%s1 + $0x748] sm:$0xff]
        %v550 = vld [vmem:[%s1 + $0x750] sm:$0xff]
        %v551 = vld [vmem:[%s1 + $0x758] sm:$0xff]
        %v552 = vld [vmem:[%s1 + $0x760] sm:$0xff]
        %v553 = vld [vmem:[%s1 + $0x768] sm:$0xff]
        %v554 = vld [vmem:[%s1 + $0x770] sm:$0xff]
        %v555 = vld [vmem:[%s1 + $0x778] sm:$0xff]
        %v556 = vld [vmem:[%s1 + $0x780] sm:$0xff]
        %v557 = vld [vmem:[%s1 + $0x788] sm:$0xff]
        %v558 = vld [vmem:[%s1 + $0x790] sm:$0xff]
        %v559 = vld [vmem:[%s1 + $0x798] sm:$0xff]
        %v560 = vld [vmem:[%s1 + $0x7a0] sm:$0xff]
        %v561 = vld [vmem:[%s1 + $0x7a8] sm:$0xff]
        %v562 = vld [vmem:[%s1 + $0x7b0] sm:$0xff]
        %v563 = vld [vmem:[%s1 + $0x7b8] sm:$0xff]
        %v564 = vld [vmem:[%s1 + $0x7c0] sm:$0xff]
        %v565 = vld [vmem:[%s1 + $0x7c8] sm:$0xff]
        %v566 = vld [vmem:[%s1 + $0x7d0] sm:$0xff]
        %v567 = vld [vmem:[%s1 + $0x7d8] sm:$0xff]
        %v568 = vld [vmem:[%s1 + $0x7e0] sm:$0xff]
        %v569 = vld [vmem:[%s1 + $0x7e8] sm:$0xff]
        %v570 = vld [vmem:[%s1 + $0x7f0] sm:$0xff]
        %v571 = vld [vmem:[%s1 + $0x7f8] sm:$0xff]
        %v572 = vld [vmem:[%s1 + $0x800] sm:$0xff]
        %v573 = vld [vmem:[%s1 + $0x808] sm:$0xff]
        %v574 = vld [vmem:[%s1 + $0x810] sm:$0xff]
        %v575 = vld [vmem:[%s1 + $0x818] sm:$0xff]
        %v576 = vld [vmem:[%s1 + $0x820] sm:$0xff]
        %v577 = vld [vmem:[%s1 + $0x828] sm:$0xff]
        %v578 = vld [vmem:[%s1 + $0x830] sm:$0xff]
        %v579 = vld [vmem:[%s1 + $0x838] sm:$0xff]
        %v580 = vld [vmem:[%s1 + $0x840] sm:$0xff]
        %v581 = vld [vmem:[%s1 + $0x848] sm:$0xff]
        %v582 = vld [vmem:[%s1 + $0x850] sm:$0xff]
        %v583 = vld [vmem:[%s1 + $0x858] sm:$0xff]
        %v584 = vld [vmem:[%s1 + $0x860] sm:$0xff]
        %v585 = vld [vmem:[%s1 + $0x868] sm:$0xff]
        %v586 = vld [vmem:[%s1 + $0x870] sm:$0xff]
        %v587 = vld [vmem:[%s1 + $0x878] sm:$0xff]
        %v588 = vld [vmem:[%s1 + $0x880] sm:$0xff]
        %v589 = vld [vmem:[%s1 + $0x888] sm:$0xff]
        %v590 = vld [vmem:[%s1 + $0x890] sm:$0xff]
        %v591 = vld [vmem:[%s1 + $0x898] sm:$0xff]
        %v592 = vld [vmem:[%s1 + $0x8a0] sm:$0xff]
        %v593 = vld [vmem:[%s1 + $0x8a8] sm:$0xff]
        %v594 = vld [vmem:[%s1 + $0x8b0] sm:$0xff]
        %v595 = vld [vmem:[%s1 + $0x8b8] sm:$0xff]
        %v596 = vld [vmem:[%s1 + $0x8c0] sm:$0xff]
        %v597 = vld [vmem:[%s1 + $0x8c8] sm:$0xff]
        %v598 = vld [vmem:[%s1 + $0x8d0] sm:$0xff]
        %v599 = vld [vmem:[%s1 + $0x8d8] sm:$0xff]
        %v600 = vld [vmem:[%s1 + $0x8e0] sm:$0xff]
        %v601 = vld [vmem:[%s1 + $0x8e8] sm:$0xff]
        %v602 = vld [vmem:[%s1 + $0x8f0] sm:$0xff]
        %v603 = vld [vmem:[%s1 + $0x8f8] sm:$0xff]
        %v604 = vld [vmem:[%s1 + $0x900] sm:$0xff]
        %v605 = vld [vmem:[%s1 + $0x908] sm:$0xff]
        %v606 = vld [vmem:[%s1 + $0x910] sm:$0xff]
        %v607 = vld [vmem:[%s1 + $0x918] sm:$0xff]
        %v608 = vld [vmem:[%s1 + $0x920] sm:$0xff]
        %v609 = vld [vmem:[%s1 + $0x928] sm:$0xff]
        %v610 = vld [vmem:[%s1 + $0x930] sm:$0xff]
        %v611 = vld [vmem:[%s1 + $0x938] sm:$0xff]
        %v612 = vld [vmem:[%s1 + $0x940] sm:$0xff]
        %v613 = vld [vmem:[%s1 + $0x948] sm:$0xff]
        %v614 = vld [vmem:[%s1 + $0x950] sm:$0xff]
        %v615 = vld [vmem:[%s1 + $0x958] sm:$0xff]
        %v616 = vld [vmem:[%s1 + $0x960] sm:$0xff]
        %v617 = vld [vmem:[%s1 + $0x968] sm:$0xff]
        %v618 = vld [vmem:[%s1 + $0x970] sm:$0xff]
        %v619 = vld [vmem:[%s1 + $0x978] sm:$0xff]
        %v620 = vld [vmem:[%s1 + $0x980] sm:$0xff]
        %v621 = vld [vmem:[%s1 + $0x988] sm:$0xff]
        %v622 = vld [vmem:[%s1 + $0x990] sm:$0xff]
        %v623 = vld [vmem:[%s1 + $0x998] sm:$0xff]
        %v624 = vld [vmem:[%s1 + $0x9a0] sm:$0xff]
        %v625 = vld [vmem:[%s1 + $0x9a8] sm:$0xff]
        %v626 = vld [vmem:[%s1 + $0x9b0] sm:$0xff]
        %v627 = vld [vmem:[%s1 + $0x9b8] sm:$0xff]
        %v628 = vld [vmem:[%s1 + $0x9c0] sm:$0xff]
        %v629 = vld [vmem:[%s1 + $0x9c8] sm:$0xff]
        %v630 = vld [vmem:[%s1 + $0x9d0] sm:$0xff]
        %v631 = vld [vmem:[%s1 + $0x9d8] sm:$0xff]
        %v632 = vld [vmem:[%s1 + $0x9e0] sm:$0xff]
        %v633 = vld [vmem:[%s1 + $0x9e8] sm:$0xff]
        %v634 = vld [vmem:[%s1 + $0x9f0] sm:$0xff]
        %v635 = vld [vmem:[%s1 + $0x9f8] sm:$0xff]
        %v636 = vld [vmem:[%s1 + $0xa00] sm:$0xff]
        %v637 = vld [vmem:[%s1 + $0xa08] sm:$0xff]
        %v638 = vld [vmem:[%s1 + $0xa10] sm:$0xff]
        %v639 = vld [vmem:[%s1 + $0xa18] sm:$0xff]
        %v640 = vld [vmem:[%s1 + $0xa20] sm:$0xff]
        %v641 = vld [vmem:[%s1 + $0xa28] sm:$0xff]
        %v642 = vld [vmem:[%s1 + $0xa30] sm:$0xff]
        %v643 = vld [vmem:[%s1 + $0xa38] sm:$0xff]
        %v644 = vld [vmem:[%s1 + $0xa40] sm:$0xff]
        %v645 = vld [vmem:[%s1 + $0xa48] sm:$0xff]
        %v646 = vld [vmem:[%s1 + $0xa50] sm:$0xff]
        %v647 = vld [vmem:[%s1 + $0xa58] sm:$0xff]
        %v648 = vld [vmem:[%s1 + $0xa60] sm:$0xff]
        %v649 = vld [vmem:[%s1 + $0xa68] sm:$0xff]
        %v650 = vld [vmem:[%s1 + $0xa70] sm:$0xff]
        %v651 = vld [vmem:[%s1 + $0xa78] sm:$0xff]
        %v652 = vld [vmem:[%s1 + $0xa80] sm:$0xff]
        %v653 = vld [vmem:[%s1 + $0xa88] sm:$0xff]
        %v654 = vld [vmem:[%s1 + $0xa90] sm:$0xff]
        %v655 = vld [vmem:[%s1 + $0xa98] sm:$0xff]
        %v656 = vld [vmem:[%s1 + $0xaa0] sm:$0xff]
        %v657 = vld [vmem:[%s1 + $0xaa8] sm:$0xff]
        %v658 = vld [vmem:[%s1 + $0xab0] sm:$0xff]
        %v659 = vld [vmem:[%s1 + $0xab8] sm:$0xff]
        %v660 = vld [vmem:[%s1 + $0xac0] sm:$0xff]
        %v661 = vld [vmem:[%s1 + $0xac8] sm:$0xff]
        %v662 = vld [vmem:[%s1 + $0xad0] sm:$0xff]
        %v663 = vld [vmem:[%s1 + $0xad8] sm:$0xff]
        %v664 = vld [vmem:[%s1 + $0xae0] sm:$0xff]
        %v665 = vld [vmem:[%s1 + $0xae8] sm:$0xff]
        %v666 = vld [vmem:[%s1 + $0xaf0] sm:$0xff]
        %v667 = vld [vmem:[%s1 + $0xaf8] sm:$0xff]
        %v668 = vld [vmem:[%s1 + $0xb00] sm:$0xff]
        %v669 = vld [vmem:[%s1 + $0xb08] sm:$0xff]
        %v670 = vld [vmem:[%s1 + $0xb10] sm:$0xff]
        %v671 = vld [vmem:[%s1 + $0xb18] sm:$0xff]
        %v672 = vld [vmem:[%s1 + $0xb20] sm:$0xff]
        %v673 = vld [vmem:[%s1 + $0xb28] sm:$0xff]
        %v674 = vld [vmem:[%s1 + $0xb30] sm:$0xff]
        %v675 = vld [vmem:[%s1 + $0xb38] sm:$0xff]
        %v676 = vld [vmem:[%s1 + $0xb40] sm:$0xff]
        %v677 = vld [vmem:[%s1 + $0xb48] sm:$0xff]
        %v678 = vld [vmem:[%s1 + $0xb50] sm:$0xff]
        %v679 = vld [vmem:[%s1 + $0xb58] sm:$0xff]
        %v680 = vld [vmem:[%s1 + $0xb60] sm:$0xff]
        %v681 = vld [vmem:[%s1 + $0xb68] sm:$0xff]
        %v682 = vld [vmem:[%s1 + $0xb70] sm:$0xff]
        %v683 = vld [vmem:[%s1 + $0xb78] sm:$0xff]
        %v684 = vld [vmem:[%s1 + $0xb80] sm:$0xff]
        %v685 = vld [vmem:[%s1 + $0xb88] sm:$0xff]
        %v686 = vld [vmem:[%s1 + $0xb90] sm:$0xff]
        %v687 = vld [vmem:[%s1 + $0xb98] sm:$0xff]
        %v688 = vld [vmem:[%s1 + $0xba0] sm:$0xff]
        %v689 = vld [vmem:[%s1 + $0xba8] sm:$0xff]
        %v690 = vld [vmem:[%s1 + $0xbb0] sm:$0xff]
        %v691 = vld [vmem:[%s1 + $0xbb8] sm:$0xff]
        %v692 = vld [vmem:[%s1 + $0xbc0] sm:$0xff]
        %v693 = vld [vmem:[%s1 + $0xbc8] sm:$0xff]
        %v694 = vld [vmem:[%s1 + $0xbd0] sm:$0xff]
        %v695 = vld [vmem:[%s1 + $0xbd8] sm:$0xff]
        %v696 = vld [vmem:[%s1 + $0xbe0] sm:$0xff]
        %v697 = vld [vmem:[%s1 + $0xbe8] sm:$0xff]
        %v698 = vld [vmem:[%s1 + $0xbf0] sm:$0xff]
        %v699 = vld [vmem:[%s1 + $0xbf8] sm:$0xff]
        %v700 = vld [vmem:[%s1 + $0xc00] sm:$0xff]
        %v701 = vld [vmem:[%s1 + $0xc08] sm:$0xff]
        %v702 = vld [vmem:[%s1 + $0xc10] sm:$0xff]
        %v703 = vld [vmem:[%s1 + $0xc18] sm:$0xff]
        %v704 = vld [vmem:[%s1 + $0xc20] sm:$0xff]
        %v705 = vld [vmem:[%s1 + $0xc28] sm:$0xff]
        %v706 = vld [vmem:[%s1 + $0xc30] sm:$0xff]
        %v707 = vld [vmem:[%s1 + $0xc38] sm:$0xff]
        %v708 = vld [vmem:[%s1 + $0xc40] sm:$0xff]
        %v709 = vld [vmem:[%s1 + $0xc48] sm:$0xff]
        %v710 = vld [vmem:[%s1 + $0xc50] sm:$0xff]
        %v711 = vld [vmem:[%s1 + $0xc58] sm:$0xff]
        %v712 = vld [vmem:[%s1 + $0xc60] sm:$0xff]
        %v713 = vld [vmem:[%s1 + $0xc68] sm:$0xff]
        %v714 = vld [vmem:[%s1 + $0xc70] sm:$0xff]
        %v715 = vld [vmem:[%s1 + $0xc78] sm:$0xff]
        %v716 = vld [vmem:[%s1 + $0xc80] sm:$0xff]
        %v717 = vld [vmem:[%s1 + $0xc88] sm:$0xff]
        %v718 = vld [vmem:[%s1 + $0xc90] sm:$0xff]
        %v719 = vld [vmem:[%s1 + $0xc98] sm:$0xff]
        %v720 = vld [vmem:[%s1 + $0xca0] sm:$0xff]
        %v721 = vld [vmem:[%s1 + $0xca8] sm:$0xff]
        %v722 = vld [vmem:[%s1 + $0xcb0] sm:$0xff]
        %v723 = vld [vmem:[%s1 + $0xcb8] sm:$0xff]
        %v724 = vld [vmem:[%s1 + $0xcc0] sm:$0xff]
        %v725 = vld [vmem:[%s1 + $0xcc8] sm:$0xff]
        %v726 = vld [vmem:[%s1 + $0xcd0] sm:$0xff]
        %v727 = vld [vmem:[%s1 + $0xcd8] sm:$0xff]
        %v728 = vld [vmem:[%s1 + $0xce0] sm:$0xff]
        %v729 = vld [vmem:[%s1 + $0xce8] sm:$0xff]
        %v730 = vld [vmem:[%s1 + $0xcf0] sm:$0xff]
        %v731 = vld [vmem:[%s1 + $0xcf8] sm:$0xff]
        %v732 = vld [vmem:[%s1 + $0xd00] sm:$0xff]
        %v733 = vld [vmem:[%s1 + $0xd08] sm:$0xff]
        %v734 = vld [vmem:[%s1 + $0xd10] sm:$0xff]
        %v735 = vld [vmem:[%s1 + $0xd18] sm:$0xff]
        %v736 = vld [vmem:[%s1 + $0xd20] sm:$0xff]
        %v737 = vld [vmem:[%s1 + $0xd28] sm:$0xff]
        %v738 = vld [vmem:[%s1 + $0xd30] sm:$0xff]
        %v739 = vld [vmem:[%s1 + $0xd38] sm:$0xff]
        %v740 = vld [vmem:[%s1 + $0xd40] sm:$0xff]
        %v741 = vld [vmem:[%s1 + $0xd48] sm:$0xff]
        %v742 = vld [vmem:[%s1 + $0xd50] sm:$0xff]
        %v743 = vld [vmem:[%s1 + $0xd58] sm:$0xff]
        %v744 = vld [vmem:[%s1 + $0xd60] sm:$0xff]
        %v745 = vld [vmem:[%s1 + $0xd68] sm:$0xff]
        %v746 = vld [vmem:[%s1 + $0xd70] sm:$0xff]
        %v747 = vld [vmem:[%s1 + $0xd78] sm:$0xff]
        %v748 = vld [vmem:[%s1 + $0xd80] sm:$0xff]
        %v749 = vld [vmem:[%s1 + $0xd88] sm:$0xff]
        %v750 = vld [vmem:[%s1 + $0xd90] sm:$0xff]
        %v751 = vld [vmem:[%s1 + $0xd98] sm:$0xff]
        %v752 = vld [vmem:[%s1 + $0xda0] sm:$0xff]
        %v753 = vld [vmem:[%s1 + $0xda8] sm:$0xff]
        %v754 = vld [vmem:[%s1 + $0xdb0] sm:$0xff]
        %v755 = vld [vmem:[%s1 + $0xdb8] sm:$0xff]
        %v756 = vld [vmem:[%s1 + $0xdc0] sm:$0xff]
        %v757 = vld [vmem:[%s1 + $0xdc8] sm:$0xff]
        %v758 = vld [vmem:[%s1 + $0xdd0] sm:$0xff]
        %v759 = vld [vmem:[%s1 + $0xdd8] sm:$0xff]
        %v760 = vld [vmem:[%s1 + $0xde0] sm:$0xff]
        %v761 = vld [vmem:[%s1 + $0xde8] sm:$0xff]
        %v762 = vld [vmem:[%s1 + $0xdf0] sm:$0xff]
        %v763 = vld [vmem:[%s1 + $0xdf8] sm:$0xff]
        %v764 = vld [vmem:[%s1 + $0xe00] sm:$0xff]
        %v765 = vld [vmem:[%s1 + $0xe08] sm:$0xff]
        %v766 = vld [vmem:[%s1 + $0xe10] sm:$0xff]
        %v767 = vld [vmem:[%s1 + $0xe18] sm:$0xff]
        %v768 = vld [vmem:[%s1 + $0xe20] sm:$0xff]
        %v769 = vld [vmem:[%s1 + $0xe28] sm:$0xff]
        %v770 = vld [vmem:[%s1 + $0xe30] sm:$0xff]
        %v771 = vld [vmem:[%s1 + $0xe38] sm:$0xff]
        %v772 = vld [vmem:[%s1 + $0xe40] sm:$0xff]
        %v773 = vld [vmem:[%s1 + $0xe48] sm:$0xff]
        %v774 = vld [vmem:[%s1 + $0xe50] sm:$0xff]
        %v775 = vld [vmem:[%s1 + $0xe58] sm:$0xff]
        %v776 = vld [vmem:[%s1 + $0xe60] sm:$0xff]
        %v777 = vld [vmem:[%s1 + $0xe68] sm:$0xff]
        %v778 = vld [vmem:[%s1 + $0xe70] sm:$0xff]
        %v779 = vld [vmem:[%s1 + $0xe78] sm:$0xff]
        %v780 = vld [vmem:[%s1 + $0xe80] sm:$0xff]
        %v781 = vld [vmem:[%s1 + $0xe88] sm:$0xff]
        %v782 = vld [vmem:[%s1 + $0xe90] sm:$0xff]
        %v783 = vld [vmem:[%s1 + $0xe98] sm:$0xff]
        %v784 = vld [vmem:[%s1 + $0xea0] sm:$0xff]
        %v785 = vld [vmem:[%s1 + $0xea8] sm:$0xff]
        %v786 = vld [vmem:[%s1 + $0xeb0] sm:$0xff]
        %v787 = vld [vmem:[%s1 + $0xeb8] sm:$0xff]
        %v788 = vld [vmem:[%s1 + $0xec0] sm:$0xff]
        %v789 = vld [vmem:[%s1 + $0xec8] sm:$0xff]
        %v790 = vld [vmem:[%s1 + $0xed0] sm:$0xff]
        %v791 = vld [vmem:[%s1 + $0xed8] sm:$0xff]
        %v792 = vld [vmem:[%s1 + $0xee0] sm:$0xff]
        %v793 = vld [vmem:[%s1 + $0xee8] sm:$0xff]
        %v794 = vld [vmem:[%s1 + $0xef0] sm:$0xff]
        %v795 = vld [vmem:[%s1 + $0xef8] sm:$0xff]
        %v796 = vld [vmem:[%s1 + $0xf00] sm:$0xff]
        %v797 = vld [vmem:[%s1 + $0xf08] sm:$0xff]
        %v798 = vld [vmem:[%s1 + $0xf10] sm:$0xff]
        %v799 = vld [vmem:[%s1 + $0xf18] sm:$0xff]
        %v800 = vld [vmem:[%s1 + $0xf20] sm:$0xff]
        %v801 = vld [vmem:[%s1 + $0xf28] sm:$0xff]
        %v802 = vld [vmem:[%s1 + $0xf30] sm:$0xff]
        %v803 = vld [vmem:[%s1 + $0xf38] sm:$0xff]
        %v804 = vld [vmem:[%s1 + $0xf40] sm:$0xff]
        %v805 = vld [vmem:[%s1 + $0xf48] sm:$0xff]
        %v806 = vld [vmem:[%s1 + $0xf50] sm:$0xff]
        %v807 = vld [vmem:[%s1 + $0xf58] sm:$0xff]
        %v808 = vld [vmem:[%s1 + $0xf60] sm:$0xff]
        %v809 = vld [vmem:[%s1 + $0xf68] sm:$0xff]
        %v810 = vld [vmem:[%s1 + $0xf70] sm:$0xff]
        %v811 = vld [vmem:[%s1 + $0xf78] sm:$0xff]
        %v812 = vld [vmem:[%s1 + $0xf80] sm:$0xff]
        %v813 = vld [vmem:[%s1 + $0xf88] sm:$0xff]
        %v814 = vld [vmem:[%s1 + $0xf90] sm:$0xff]
        %v815 = vld [vmem:[%s1 + $0xf98] sm:$0xff]
        %v816 = vld [vmem:[%s1 + $0xfa0] sm:$0xff]
        %v817 = vld [vmem:[%s1 + $0xfa8] sm:$0xff]
        %v818 = vld [vmem:[%s1 + $0xfb0] sm:$0xff]
        %v819 = vld [vmem:[%s1 + $0xfb8] sm:$0xff]
        %v820 = vld [vmem:[%s1 + $0xfc0] sm:$0xff]
        %v821 = vld [vmem:[%s1 + $0xfc8] sm:$0xff]
        %v822 = vld [vmem:[%s1 + $0xfd0] sm:$0xff]
        %v823 = vld [vmem:[%s1 + $0xfd8] sm:$0xff]
        %v824 = vld [vmem:[%s1 + $0xfe0] sm:$0xff]
        %v825 = vld [vmem:[%s1 + $0xfe8] sm:$0xff]
        %v826 = vld [vmem:[%s1 + $0xff0] sm:$0xff]
        %v827 = vld [vmem:[%s1 + $0xff8] sm:$0xff]
        %v828 = vld [vmem:[%s279] sm:$0xff]
        %v829 = vld [vmem:[%s2] sm:$0xff]
        %v830 = vld [vmem:[%s2 + $0x8] sm:$0xff]
        %v831 = vld [vmem:[%s2 + $0x10] sm:$0xff]
        %v832 = vld [vmem:[%s2 + $0x18] sm:$0xff]
        %vm833 = vcmask 261120
        %v835 = vsel %vm833, %v828, 0
        %837 = vmatpush.msra.mxu0 0.0
        %838 = vmatpush.msra.mxu0 0.0
        %839 = vmatpush.msra.mxu0 0.0
        %840 = vmatpush.msra.mxu0 0.0
        %841 = vmatpush.msra.mxu0 0.0
        %842 = vmatpush.msra.mxu0 0.0
        %843 = vmatpush.msra.mxu0 0.0
        %844 = vmatpush.msra.mxu0 0.0
        %845 = vmatpush.msra.mxu0 0.0
        %846 = vmatpush.msra.mxu0 0.0
        %847 = vmatpush.msra.mxu0 0.0
        %848 = vmatpush.msra.mxu0 0.0
        %849 = vmatpush.msra.mxu0 %v832
        %850 = vmatpush.msra.mxu0 %v831
        %851 = vmatpush.msra.mxu0 %v830
        %852 = vmatpush.msra.mxu0 %v829
        %853 = vmatmul.f32.gmra.mxu0 %v835
        %v854 = vpop.f32.mrf.mxu0
        %v855 = vadd.f32 0.0, %v854
        %856 = vdwg.mxu0
        %v857 = vld [vmem:[%s283] sm:$0xff]
        %858 = vmatpush.msra.mxu0 %v331
        %859 = vmatpush.msra.mxu0 %v330
        %860 = vmatpush.msra.mxu0 %v329
        %861 = vmatpush.msra.mxu0 %v328
        %862 = vmatpush.msra.mxu0 %v327
        %863 = vmatpush.msra.mxu0 %v326
        %864 = vmatpush.msra.mxu0 %v325
        %865 = vmatpush.msra.mxu0 %v324
        %866 = vmatpush.msra.mxu0 %v323
        %867 = vmatpush.msra.mxu0 %v322
        %868 = vmatpush.msra.mxu0 %v321
        %869 = vmatpush.msra.mxu0 %v320
        %870 = vmatpush.msra.mxu0 %v319
        %871 = vmatpush.msra.mxu0 %v318
        %872 = vmatpush.msra.mxu0 %v317
        %873 = vmatpush.msra.mxu0 %v316
        %874 = vmatmul.f32.gmra.mxu0 %v284
        %v875 = vpop.f32.mrf.mxu0
        %v876 = vadd.f32 %v855, %v875
        %877 = vdwg.mxu0
        %878 = vmatpush.msra.mxu0 %v347
        %879 = vmatpush.msra.mxu0 %v346
        %880 = vmatpush.msra.mxu0 %v345
        %881 = vmatpush.msra.mxu0 %v344
        %882 = vmatpush.msra.mxu0 %v343
        %883 = vmatpush.msra.mxu0 %v342
        %884 = vmatpush.msra.mxu0 %v341
        %885 = vmatpush.msra.mxu0 %v340
        %886 = vmatpush.msra.mxu0 %v339
        %887 = vmatpush.msra.mxu0 %v338
        %888 = vmatpush.msra.mxu0 %v337
        %889 = vmatpush.msra.mxu0 %v336
        %890 = vmatpush.msra.mxu0 %v335
        %891 = vmatpush.msra.mxu0 %v334
        %892 = vmatpush.msra.mxu0 %v333
        %893 = vmatpush.msra.mxu0 %v332
        %894 = vmatmul.f32.gmra.mxu0 %v285
        %v895 = vpop.f32.mrf.mxu0
        %v896 = vadd.f32 %v876, %v895
        %897 = vdwg.mxu0
        %898 = vmatpush.msra.mxu0 %v363
        %899 = vmatpush.msra.mxu0 %v362
        %900 = vmatpush.msra.mxu0 %v361
        %901 = vmatpush.msra.mxu0 %v360
        %902 = vmatpush.msra.mxu0 %v359
        %903 = vmatpush.msra.mxu0 %v358
        %904 = vmatpush.msra.mxu0 %v357
        %905 = vmatpush.msra.mxu0 %v356
        %906 = vmatpush.msra.mxu0 %v355
        %907 = vmatpush.msra.mxu0 %v354
        %908 = vmatpush.msra.mxu0 %v353
        %909 = vmatpush.msra.mxu0 %v352
        %910 = vmatpush.msra.mxu0 %v351
        %911 = vmatpush.msra.mxu0 %v350
        %912 = vmatpush.msra.mxu0 %v349
        %913 = vmatpush.msra.mxu0 %v348
        %914 = vmatmul.f32.gmra.mxu0 %v286
        %v915 = vpop.f32.mrf.mxu0
        %v916 = vadd.f32 %v896, %v915
        %917 = vdwg.mxu0
        %918 = vmatpush.msra.mxu0 %v379
        %919 = vmatpush.msra.mxu0 %v378
        %920 = vmatpush.msra.mxu0 %v377
        %921 = vmatpush.msra.mxu0 %v376
        %922 = vmatpush.msra.mxu0 %v375
        %923 = vmatpush.msra.mxu0 %v374
        %924 = vmatpush.msra.mxu0 %v373
        %925 = vmatpush.msra.mxu0 %v372
        %926 = vmatpush.msra.mxu0 %v371
        %927 = vmatpush.msra.mxu0 %v370
        %928 = vmatpush.msra.mxu0 %v369
        %929 = vmatpush.msra.mxu0 %v368
        %930 = vmatpush.msra.mxu0 %v367
        %931 = vmatpush.msra.mxu0 %v366
        %932 = vmatpush.msra.mxu0 %v365
        %933 = vmatpush.msra.mxu0 %v364
        %934 = vmatmul.f32.gmra.mxu0 %v287
        %v935 = vpop.f32.mrf.mxu0
        %v936 = vadd.f32 %v916, %v935
        %937 = vdwg.mxu0
        %938 = vmatpush.msra.mxu0 %v395
        %939 = vmatpush.msra.mxu0 %v394
        %940 = vmatpush.msra.mxu0 %v393
        %941 = vmatpush.msra.mxu0 %v392
        %942 = vmatpush.msra.mxu0 %v391
        %943 = vmatpush.msra.mxu0 %v390
        %944 = vmatpush.msra.mxu0 %v389
        %945 = vmatpush.msra.mxu0 %v388
        %946 = vmatpush.msra.mxu0 %v387
        %947 = vmatpush.msra.mxu0 %v386
        %948 = vmatpush.msra.mxu0 %v385
        %949 = vmatpush.msra.mxu0 %v384
        %950 = vmatpush.msra.mxu0 %v383
        %951 = vmatpush.msra.mxu0 %v382
        %952 = vmatpush.msra.mxu0 %v381
        %953 = vmatpush.msra.mxu0 %v380
        %954 = vmatmul.f32.gmra.mxu0 %v288
        %v955 = vpop.f32.mrf.mxu0
        %v956 = vadd.f32 %v936, %v955
        %957 = vdwg.mxu0
        %958 = vmatpush.msra.mxu0 %v411
        %959 = vmatpush.msra.mxu0 %v410
        %960 = vmatpush.msra.mxu0 %v409
        %961 = vmatpush.msra.mxu0 %v408
        %962 = vmatpush.msra.mxu0 %v407
        %963 = vmatpush.msra.mxu0 %v406
        %964 = vmatpush.msra.mxu0 %v405
        %965 = vmatpush.msra.mxu0 %v404
        %966 = vmatpush.msra.mxu0 %v403
        %967 = vmatpush.msra.mxu0 %v402
        %968 = vmatpush.msra.mxu0 %v401
        %969 = vmatpush.msra.mxu0 %v400
        %970 = vmatpush.msra.mxu0 %v399
        %971 = vmatpush.msra.mxu0 %v398
        %972 = vmatpush.msra.mxu0 %v397
        %973 = vmatpush.msra.mxu0 %v396
        %974 = vmatmul.f32.gmra.mxu0 %v289
        %v975 = vpop.f32.mrf.mxu0
        %v976 = vadd.f32 %v956, %v975
        %977 = vdwg.mxu0
        %978 = vmatpush.msra.mxu0 %v427
        %979 = vmatpush.msra.mxu0 %v426
        %980 = vmatpush.msra.mxu0 %v425
        %981 = vmatpush.msra.mxu0 %v424
        %982 = vmatpush.msra.mxu0 %v423
        %983 = vmatpush.msra.mxu0 %v422
        %984 = vmatpush.msra.mxu0 %v421
        %985 = vmatpush.msra.mxu0 %v420
        %986 = vmatpush.msra.mxu0 %v419
        %987 = vmatpush.msra.mxu0 %v418
        %988 = vmatpush.msra.mxu0 %v417
        %989 = vmatpush.msra.mxu0 %v416
        %990 = vmatpush.msra.mxu0 %v415
        %991 = vmatpush.msra.mxu0 %v414
        %992 = vmatpush.msra.mxu0 %v413
        %993 = vmatpush.msra.mxu0 %v412
        %994 = vmatmul.f32.gmra.mxu0 %v290
        %v995 = vpop.f32.mrf.mxu0
        %v996 = vadd.f32 %v976, %v995
        %997 = vdwg.mxu0
        %998 = vmatpush.msra.mxu0 %v443
        %999 = vmatpush.msra.mxu0 %v442
        %1000 = vmatpush.msra.mxu0 %v441
        %1001 = vmatpush.msra.mxu0 %v440
        %1002 = vmatpush.msra.mxu0 %v439
        %1003 = vmatpush.msra.mxu0 %v438
        %1004 = vmatpush.msra.mxu0 %v437
        %1005 = vmatpush.msra.mxu0 %v436
        %1006 = vmatpush.msra.mxu0 %v435
        %1007 = vmatpush.msra.mxu0 %v434
        %1008 = vmatpush.msra.mxu0 %v433
        %1009 = vmatpush.msra.mxu0 %v432
        %1010 = vmatpush.msra.mxu0 %v431
        %1011 = vmatpush.msra.mxu0 %v430
        %1012 = vmatpush.msra.mxu0 %v429
        %1013 = vmatpush.msra.mxu0 %v428
        %1014 = vmatmul.f32.gmra.mxu0 %v291
        %v1015 = vpop.f32.mrf.mxu0
        %v1016 = vadd.f32 %v996, %v1015
        %1017 = vdwg.mxu0
        %1018 = vmatpush.msra.mxu0 %v459
        %1019 = vmatpush.msra.mxu0 %v458
        %1020 = vmatpush.msra.mxu0 %v457
        %1021 = vmatpush.msra.mxu0 %v456
        %1022 = vmatpush.msra.mxu0 %v455
        %1023 = vmatpush.msra.mxu0 %v454
        %1024 = vmatpush.msra.mxu0 %v453
        %1025 = vmatpush.msra.mxu0 %v452
        %1026 = vmatpush.msra.mxu0 %v451
        %1027 = vmatpush.msra.mxu0 %v450
        %1028 = vmatpush.msra.mxu0 %v449
        %1029 = vmatpush.msra.mxu0 %v448
        %1030 = vmatpush.msra.mxu0 %v447
        %1031 = vmatpush.msra.mxu0 %v446
        %1032 = vmatpush.msra.mxu0 %v445
        %1033 = vmatpush.msra.mxu0 %v444
        %1034 = vmatmul.f32.gmra.mxu0 %v292
        %v1035 = vpop.f32.mrf.mxu0
        %v1036 = vadd.f32 %v1016, %v1035
        %1037 = vdwg.mxu0
        %1038 = vmatpush.msra.mxu0 %v475
        %1039 = vmatpush.msra.mxu0 %v474
        %1040 = vmatpush.msra.mxu0 %v473
        %1041 = vmatpush.msra.mxu0 %v472
        %1042 = vmatpush.msra.mxu0 %v471
        %1043 = vmatpush.msra.mxu0 %v470
        %1044 = vmatpush.msra.mxu0 %v469
        %1045 = vmatpush.msra.mxu0 %v468
        %1046 = vmatpush.msra.mxu0 %v467
        %1047 = vmatpush.msra.mxu0 %v466
        %1048 = vmatpush.msra.mxu0 %v465
        %1049 = vmatpush.msra.mxu0 %v464
        %1050 = vmatpush.msra.mxu0 %v463
        %1051 = vmatpush.msra.mxu0 %v462
        %1052 = vmatpush.msra.mxu0 %v461
        %1053 = vmatpush.msra.mxu0 %v460
        %1054 = vmatmul.f32.gmra.mxu0 %v293
        %v1055 = vpop.f32.mrf.mxu0
        %v1056 = vadd.f32 %v1036, %v1055
        %1057 = vdwg.mxu0
        %1058 = vmatpush.msra.mxu0 %v491
        %1059 = vmatpush.msra.mxu0 %v490
        %1060 = vmatpush.msra.mxu0 %v489
        %1061 = vmatpush.msra.mxu0 %v488
        %1062 = vmatpush.msra.mxu0 %v487
        %1063 = vmatpush.msra.mxu0 %v486
        %1064 = vmatpush.msra.mxu0 %v485
        %1065 = vmatpush.msra.mxu0 %v484
        %1066 = vmatpush.msra.mxu0 %v483
        %1067 = vmatpush.msra.mxu0 %v482
        %1068 = vmatpush.msra.mxu0 %v481
        %1069 = vmatpush.msra.mxu0 %v480
        %1070 = vmatpush.msra.mxu0 %v479
        %1071 = vmatpush.msra.mxu0 %v478
        %1072 = vmatpush.msra.mxu0 %v477
        %1073 = vmatpush.msra.mxu0 %v476
        %1074 = vmatmul.f32.gmra.mxu0 %v294
        %v1075 = vpop.f32.mrf.mxu0
        %v1076 = vadd.f32 %v1056, %v1075
        %1077 = vdwg.mxu0
        %1078 = vmatpush.msra.mxu0 %v507
        %1079 = vmatpush.msra.mxu0 %v506
        %1080 = vmatpush.msra.mxu0 %v505
        %1081 = vmatpush.msra.mxu0 %v504
        %1082 = vmatpush.msra.mxu0 %v503
        %1083 = vmatpush.msra.mxu0 %v502
        %1084 = vmatpush.msra.mxu0 %v501
        %1085 = vmatpush.msra.mxu0 %v500
        %1086 = vmatpush.msra.mxu0 %v499
        %1087 = vmatpush.msra.mxu0 %v498
        %1088 = vmatpush.msra.mxu0 %v497
        %1089 = vmatpush.msra.mxu0 %v496
        %1090 = vmatpush.msra.mxu0 %v495
        %1091 = vmatpush.msra.mxu0 %v494
        %1092 = vmatpush.msra.mxu0 %v493
        %1093 = vmatpush.msra.mxu0 %v492
        %1094 = vmatmul.f32.gmra.mxu0 %v295
        %v1095 = vpop.f32.mrf.mxu0
        %v1096 = vadd.f32 %v1076, %v1095
        %1097 = vdwg.mxu0
        %1098 = vmatpush.msra.mxu0 %v523
        %1099 = vmatpush.msra.mxu0 %v522
        %1100 = vmatpush.msra.mxu0 %v521
        %1101 = vmatpush.msra.mxu0 %v520
        %1102 = vmatpush.msra.mxu0 %v519
        %1103 = vmatpush.msra.mxu0 %v518
        %1104 = vmatpush.msra.mxu0 %v517
        %1105 = vmatpush.msra.mxu0 %v516
        %1106 = vmatpush.msra.mxu0 %v515
        %1107 = vmatpush.msra.mxu0 %v514
        %1108 = vmatpush.msra.mxu0 %v513
        %1109 = vmatpush.msra.mxu0 %v512
        %1110 = vmatpush.msra.mxu0 %v511
        %1111 = vmatpush.msra.mxu0 %v510
        %1112 = vmatpush.msra.mxu0 %v509
        %1113 = vmatpush.msra.mxu0 %v508
        %1114 = vmatmul.f32.gmra.mxu0 %v296
        %v1115 = vpop.f32.mrf.mxu0
        %v1116 = vadd.f32 %v1096, %v1115
        %1117 = vdwg.mxu0
        %1118 = vmatpush.msra.mxu0 %v539
        %1119 = vmatpush.msra.mxu0 %v538
        %1120 = vmatpush.msra.mxu0 %v537
        %1121 = vmatpush.msra.mxu0 %v536
        %1122 = vmatpush.msra.mxu0 %v535
        %1123 = vmatpush.msra.mxu0 %v534
        %1124 = vmatpush.msra.mxu0 %v533
        %1125 = vmatpush.msra.mxu0 %v532
        %1126 = vmatpush.msra.mxu0 %v531
        %1127 = vmatpush.msra.mxu0 %v530
        %1128 = vmatpush.msra.mxu0 %v529
        %1129 = vmatpush.msra.mxu0 %v528
        %1130 = vmatpush.msra.mxu0 %v527
        %1131 = vmatpush.msra.mxu0 %v526
        %1132 = vmatpush.msra.mxu0 %v525
        %1133 = vmatpush.msra.mxu0 %v524
        %1134 = vmatmul.f32.gmra.mxu0 %v297
        %v1135 = vpop.f32.mrf.mxu0
        %v1136 = vadd.f32 %v1116, %v1135
        %1137 = vdwg.mxu0
        %1138 = vmatpush.msra.mxu0 %v555
        %1139 = vmatpush.msra.mxu0 %v554
        %1140 = vmatpush.msra.mxu0 %v553
        %1141 = vmatpush.msra.mxu0 %v552
        %1142 = vmatpush.msra.mxu0 %v551
        %1143 = vmatpush.msra.mxu0 %v550
        %1144 = vmatpush.msra.mxu0 %v549
        %1145 = vmatpush.msra.mxu0 %v548
        %1146 = vmatpush.msra.mxu0 %v547
        %1147 = vmatpush.msra.mxu0 %v546
        %1148 = vmatpush.msra.mxu0 %v545
        %1149 = vmatpush.msra.mxu0 %v544
        %1150 = vmatpush.msra.mxu0 %v543
        %1151 = vmatpush.msra.mxu0 %v542
        %1152 = vmatpush.msra.mxu0 %v541
        %1153 = vmatpush.msra.mxu0 %v540
        %1154 = vmatmul.f32.gmra.mxu0 %v298
        %v1155 = vpop.f32.mrf.mxu0
        %v1156 = vadd.f32 %v1136, %v1155
        %1157 = vdwg.mxu0
        %1158 = vmatpush.msra.mxu0 %v571
        %1159 = vmatpush.msra.mxu0 %v570
        %1160 = vmatpush.msra.mxu0 %v569
        %1161 = vmatpush.msra.mxu0 %v568
        %1162 = vmatpush.msra.mxu0 %v567
        %1163 = vmatpush.msra.mxu0 %v566
        %1164 = vmatpush.msra.mxu0 %v565
        %1165 = vmatpush.msra.mxu0 %v564
        %1166 = vmatpush.msra.mxu0 %v563
        %1167 = vmatpush.msra.mxu0 %v562
        %1168 = vmatpush.msra.mxu0 %v561
        %1169 = vmatpush.msra.mxu0 %v560
        %1170 = vmatpush.msra.mxu0 %v559
        %1171 = vmatpush.msra.mxu0 %v558
        %1172 = vmatpush.msra.mxu0 %v557
        %1173 = vmatpush.msra.mxu0 %v556
        %1174 = vmatmul.f32.gmra.mxu0 %v299
        %v1175 = vpop.f32.mrf.mxu0
        %v1176 = vadd.f32 %v1156, %v1175
        %1177 = vdwg.mxu0
        %1178 = vmatpush.msra.mxu0 %v587
        %1179 = vmatpush.msra.mxu0 %v586
        %1180 = vmatpush.msra.mxu0 %v585
        %1181 = vmatpush.msra.mxu0 %v584
        %1182 = vmatpush.msra.mxu0 %v583
        %1183 = vmatpush.msra.mxu0 %v582
        %1184 = vmatpush.msra.mxu0 %v581
        %1185 = vmatpush.msra.mxu0 %v580
        %1186 = vmatpush.msra.mxu0 %v579
        %1187 = vmatpush.msra.mxu0 %v578
        %1188 = vmatpush.msra.mxu0 %v577
        %1189 = vmatpush.msra.mxu0 %v576
        %1190 = vmatpush.msra.mxu0 %v575
        %1191 = vmatpush.msra.mxu0 %v574
        %1192 = vmatpush.msra.mxu0 %v573
        %1193 = vmatpush.msra.mxu0 %v572
        %1194 = vmatmul.f32.gmra.mxu0 %v300
        %v1195 = vpop.f32.mrf.mxu0
        %v1196 = vadd.f32 %v1176, %v1195
        %1197 = vdwg.mxu0
        %1198 = vmatpush.msra.mxu0 %v603
        %1199 = vmatpush.msra.mxu0 %v602
        %1200 = vmatpush.msra.mxu0 %v601
        %1201 = vmatpush.msra.mxu0 %v600
        %1202 = vmatpush.msra.mxu0 %v599
        %1203 = vmatpush.msra.mxu0 %v598
        %1204 = vmatpush.msra.mxu0 %v597
        %1205 = vmatpush.msra.mxu0 %v596
        %1206 = vmatpush.msra.mxu0 %v595
        %1207 = vmatpush.msra.mxu0 %v594
        %1208 = vmatpush.msra.mxu0 %v593
        %1209 = vmatpush.msra.mxu0 %v592
        %1210 = vmatpush.msra.mxu0 %v591
        %1211 = vmatpush.msra.mxu0 %v590
        %1212 = vmatpush.msra.mxu0 %v589
        %1213 = vmatpush.msra.mxu0 %v588
        %1214 = vmatmul.f32.gmra.mxu0 %v301
        %v1215 = vpop.f32.mrf.mxu0
        %v1216 = vadd.f32 %v1196, %v1215
        %1217 = vdwg.mxu0
        %1218 = vmatpush.msra.mxu0 %v619
        %1219 = vmatpush.msra.mxu0 %v618
        %1220 = vmatpush.msra.mxu0 %v617
        %1221 = vmatpush.msra.mxu0 %v616
        %1222 = vmatpush.msra.mxu0 %v615
        %1223 = vmatpush.msra.mxu0 %v614
        %1224 = vmatpush.msra.mxu0 %v613
        %1225 = vmatpush.msra.mxu0 %v612
        %1226 = vmatpush.msra.mxu0 %v611
        %1227 = vmatpush.msra.mxu0 %v610
        %1228 = vmatpush.msra.mxu0 %v609
        %1229 = vmatpush.msra.mxu0 %v608
        %1230 = vmatpush.msra.mxu0 %v607
        %1231 = vmatpush.msra.mxu0 %v606
        %1232 = vmatpush.msra.mxu0 %v605
        %1233 = vmatpush.msra.mxu0 %v604
        %1234 = vmatmul.f32.gmra.mxu0 %v302
        %v1235 = vpop.f32.mrf.mxu0
        %v1236 = vadd.f32 %v1216, %v1235
        %1237 = vdwg.mxu0
        %1238 = vmatpush.msra.mxu0 %v635
        %1239 = vmatpush.msra.mxu0 %v634
        %1240 = vmatpush.msra.mxu0 %v633
        %1241 = vmatpush.msra.mxu0 %v632
        %1242 = vmatpush.msra.mxu0 %v631
        %1243 = vmatpush.msra.mxu0 %v630
        %1244 = vmatpush.msra.mxu0 %v629
        %1245 = vmatpush.msra.mxu0 %v628
        %1246 = vmatpush.msra.mxu0 %v627
        %1247 = vmatpush.msra.mxu0 %v626
        %1248 = vmatpush.msra.mxu0 %v625
        %1249 = vmatpush.msra.mxu0 %v624
        %1250 = vmatpush.msra.mxu0 %v623
        %1251 = vmatpush.msra.mxu0 %v622
        %1252 = vmatpush.msra.mxu0 %v621
        %1253 = vmatpush.msra.mxu0 %v620
        %1254 = vmatmul.f32.gmra.mxu0 %v303
        %v1255 = vpop.f32.mrf.mxu0
        %v1256 = vadd.f32 %v1236, %v1255
        %1257 = vdwg.mxu0
        %1258 = vmatpush.msra.mxu0 %v651
        %1259 = vmatpush.msra.mxu0 %v650
        %1260 = vmatpush.msra.mxu0 %v649
        %1261 = vmatpush.msra.mxu0 %v648
        %1262 = vmatpush.msra.mxu0 %v647
        %1263 = vmatpush.msra.mxu0 %v646
        %1264 = vmatpush.msra.mxu0 %v645
        %1265 = vmatpush.msra.mxu0 %v644
        %1266 = vmatpush.msra.mxu0 %v643
        %1267 = vmatpush.msra.mxu0 %v642
        %1268 = vmatpush.msra.mxu0 %v641
        %1269 = vmatpush.msra.mxu0 %v640
        %1270 = vmatpush.msra.mxu0 %v639
        %1271 = vmatpush.msra.mxu0 %v638
        %1272 = vmatpush.msra.mxu0 %v637
        %1273 = vmatpush.msra.mxu0 %v636
        %1274 = vmatmul.f32.gmra.mxu0 %v304
        %v1275 = vpop.f32.mrf.mxu0
        %v1276 = vadd.f32 %v1256, %v1275
        %1277 = vdwg.mxu0
        %1278 = vmatpush.msra.mxu0 %v667
        %1279 = vmatpush.msra.mxu0 %v666
        %1280 = vmatpush.msra.mxu0 %v665
        %1281 = vmatpush.msra.mxu0 %v664
        %1282 = vmatpush.msra.mxu0 %v663
        %1283 = vmatpush.msra.mxu0 %v662
        %1284 = vmatpush.msra.mxu0 %v661
        %1285 = vmatpush.msra.mxu0 %v660
        %1286 = vmatpush.msra.mxu0 %v659
        %1287 = vmatpush.msra.mxu0 %v658
        %1288 = vmatpush.msra.mxu0 %v657
        %1289 = vmatpush.msra.mxu0 %v656
        %1290 = vmatpush.msra.mxu0 %v655
        %1291 = vmatpush.msra.mxu0 %v654
        %1292 = vmatpush.msra.mxu0 %v653
        %1293 = vmatpush.msra.mxu0 %v652
        %1294 = vmatmul.f32.gmra.mxu0 %v305
        %v1295 = vpop.f32.mrf.mxu0
        %v1296 = vadd.f32 %v1276, %v1295
        %1297 = vdwg.mxu0
        %1298 = vmatpush.msra.mxu0 %v683
        %1299 = vmatpush.msra.mxu0 %v682
        %1300 = vmatpush.msra.mxu0 %v681
        %1301 = vmatpush.msra.mxu0 %v680
        %1302 = vmatpush.msra.mxu0 %v679
        %1303 = vmatpush.msra.mxu0 %v678
        %1304 = vmatpush.msra.mxu0 %v677
        %1305 = vmatpush.msra.mxu0 %v676
        %1306 = vmatpush.msra.mxu0 %v675
        %1307 = vmatpush.msra.mxu0 %v674
        %1308 = vmatpush.msra.mxu0 %v673
        %1309 = vmatpush.msra.mxu0 %v672
        %1310 = vmatpush.msra.mxu0 %v671
        %1311 = vmatpush.msra.mxu0 %v670
        %1312 = vmatpush.msra.mxu0 %v669
        %1313 = vmatpush.msra.mxu0 %v668
        %1314 = vmatmul.f32.gmra.mxu0 %v306
        %v1315 = vpop.f32.mrf.mxu0
        %v1316 = vadd.f32 %v1296, %v1315
        %1317 = vdwg.mxu0
        %1318 = vmatpush.msra.mxu0 %v699
        %1319 = vmatpush.msra.mxu0 %v698
        %1320 = vmatpush.msra.mxu0 %v697
        %1321 = vmatpush.msra.mxu0 %v696
        %1322 = vmatpush.msra.mxu0 %v695
        %1323 = vmatpush.msra.mxu0 %v694
        %1324 = vmatpush.msra.mxu0 %v693
        %1325 = vmatpush.msra.mxu0 %v692
        %1326 = vmatpush.msra.mxu0 %v691
        %1327 = vmatpush.msra.mxu0 %v690
        %1328 = vmatpush.msra.mxu0 %v689
        %1329 = vmatpush.msra.mxu0 %v688
        %1330 = vmatpush.msra.mxu0 %v687
        %1331 = vmatpush.msra.mxu0 %v686
        %1332 = vmatpush.msra.mxu0 %v685
        %1333 = vmatpush.msra.mxu0 %v684
        %1334 = vmatmul.f32.gmra.mxu0 %v307
        %v1335 = vpop.f32.mrf.mxu0
        %v1336 = vadd.f32 %v1316, %v1335
        %1337 = vdwg.mxu0
        %1338 = vmatpush.msra.mxu0 %v715
        %1339 = vmatpush.msra.mxu0 %v714
        %1340 = vmatpush.msra.mxu0 %v713
        %1341 = vmatpush.msra.mxu0 %v712
        %1342 = vmatpush.msra.mxu0 %v711
        %1343 = vmatpush.msra.mxu0 %v710
        %1344 = vmatpush.msra.mxu0 %v709
        %1345 = vmatpush.msra.mxu0 %v708
        %1346 = vmatpush.msra.mxu0 %v707
        %1347 = vmatpush.msra.mxu0 %v706
        %1348 = vmatpush.msra.mxu0 %v705
        %1349 = vmatpush.msra.mxu0 %v704
        %1350 = vmatpush.msra.mxu0 %v703
        %1351 = vmatpush.msra.mxu0 %v702
        %1352 = vmatpush.msra.mxu0 %v701
        %1353 = vmatpush.msra.mxu0 %v700
        %1354 = vmatmul.f32.gmra.mxu0 %v308
        %v1355 = vpop.f32.mrf.mxu0
        %v1356 = vadd.f32 %v1336, %v1355
        %1357 = vdwg.mxu0
        %1358 = vmatpush.msra.mxu0 %v731
        %1359 = vmatpush.msra.mxu0 %v730
        %1360 = vmatpush.msra.mxu0 %v729
        %1361 = vmatpush.msra.mxu0 %v728
        %1362 = vmatpush.msra.mxu0 %v727
        %1363 = vmatpush.msra.mxu0 %v726
        %1364 = vmatpush.msra.mxu0 %v725
        %1365 = vmatpush.msra.mxu0 %v724
        %1366 = vmatpush.msra.mxu0 %v723
        %1367 = vmatpush.msra.mxu0 %v722
        %1368 = vmatpush.msra.mxu0 %v721
        %1369 = vmatpush.msra.mxu0 %v720
        %1370 = vmatpush.msra.mxu0 %v719
        %1371 = vmatpush.msra.mxu0 %v718
        %1372 = vmatpush.msra.mxu0 %v717
        %1373 = vmatpush.msra.mxu0 %v716
        %1374 = vmatmul.f32.gmra.mxu0 %v309
        %v1375 = vpop.f32.mrf.mxu0
        %v1376 = vadd.f32 %v1356, %v1375
        %1377 = vdwg.mxu0
        %1378 = vmatpush.msra.mxu0 %v747
        %1379 = vmatpush.msra.mxu0 %v746
        %1380 = vmatpush.msra.mxu0 %v745
        %1381 = vmatpush.msra.mxu0 %v744
        %1382 = vmatpush.msra.mxu0 %v743
        %1383 = vmatpush.msra.mxu0 %v742
        %1384 = vmatpush.msra.mxu0 %v741
        %1385 = vmatpush.msra.mxu0 %v740
        %1386 = vmatpush.msra.mxu0 %v739
        %1387 = vmatpush.msra.mxu0 %v738
        %1388 = vmatpush.msra.mxu0 %v737
        %1389 = vmatpush.msra.mxu0 %v736
        %1390 = vmatpush.msra.mxu0 %v735
        %1391 = vmatpush.msra.mxu0 %v734
        %1392 = vmatpush.msra.mxu0 %v733
        %1393 = vmatpush.msra.mxu0 %v732
        %1394 = vmatmul.f32.gmra.mxu0 %v310
        %v1395 = vpop.f32.mrf.mxu0
        %v1396 = vadd.f32 %v1376, %v1395
        %1397 = vdwg.mxu0
        %1398 = vmatpush.msra.mxu0 %v763
        %1399 = vmatpush.msra.mxu0 %v762
        %1400 = vmatpush.msra.mxu0 %v761
        %1401 = vmatpush.msra.mxu0 %v760
        %1402 = vmatpush.msra.mxu0 %v759
        %1403 = vmatpush.msra.mxu0 %v758
        %1404 = vmatpush.msra.mxu0 %v757
        %1405 = vmatpush.msra.mxu0 %v756
        %1406 = vmatpush.msra.mxu0 %v755
        %1407 = vmatpush.msra.mxu0 %v754
        %1408 = vmatpush.msra.mxu0 %v753
        %1409 = vmatpush.msra.mxu0 %v752
        %1410 = vmatpush.msra.mxu0 %v751
        %1411 = vmatpush.msra.mxu0 %v750
        %1412 = vmatpush.msra.mxu0 %v749
        %1413 = vmatpush.msra.mxu0 %v748
        %1414 = vmatmul.f32.gmra.mxu0 %v311
        %v1415 = vpop.f32.mrf.mxu0
        %v1416 = vadd.f32 %v1396, %v1415
        %1417 = vdwg.mxu0
        %1418 = vmatpush.msra.mxu0 %v779
        %1419 = vmatpush.msra.mxu0 %v778
        %1420 = vmatpush.msra.mxu0 %v777
        %1421 = vmatpush.msra.mxu0 %v776
        %1422 = vmatpush.msra.mxu0 %v775
        %1423 = vmatpush.msra.mxu0 %v774
        %1424 = vmatpush.msra.mxu0 %v773
        %1425 = vmatpush.msra.mxu0 %v772
        %1426 = vmatpush.msra.mxu0 %v771
        %1427 = vmatpush.msra.mxu0 %v770
        %1428 = vmatpush.msra.mxu0 %v769
        %1429 = vmatpush.msra.mxu0 %v768
        %1430 = vmatpush.msra.mxu0 %v767
        %1431 = vmatpush.msra.mxu0 %v766
        %1432 = vmatpush.msra.mxu0 %v765
        %1433 = vmatpush.msra.mxu0 %v764
        %1434 = vmatmul.f32.gmra.mxu0 %v312
        %v1435 = vpop.f32.mrf.mxu0
        %v1436 = vadd.f32 %v1416, %v1435
        %1437 = vdwg.mxu0
        %1438 = vmatpush.msra.mxu0 %v795
        %1439 = vmatpush.msra.mxu0 %v794
        %1440 = vmatpush.msra.mxu0 %v793
        %1441 = vmatpush.msra.mxu0 %v792
        %1442 = vmatpush.msra.mxu0 %v791
        %1443 = vmatpush.msra.mxu0 %v790
        %1444 = vmatpush.msra.mxu0 %v789
        %1445 = vmatpush.msra.mxu0 %v788
        %1446 = vmatpush.msra.mxu0 %v787
        %1447 = vmatpush.msra.mxu0 %v786
        %1448 = vmatpush.msra.mxu0 %v785
        %1449 = vmatpush.msra.mxu0 %v784
        %1450 = vmatpush.msra.mxu0 %v783
        %1451 = vmatpush.msra.mxu0 %v782
        %1452 = vmatpush.msra.mxu0 %v781
        %1453 = vmatpush.msra.mxu0 %v780
        %1454 = vmatmul.f32.gmra.mxu0 %v313
        %v1455 = vpop.f32.mrf.mxu0
        %v1456 = vadd.f32 %v1436, %v1455
        %1457 = vdwg.mxu0
        %1458 = vmatpush.msra.mxu0 %v811
        %1459 = vmatpush.msra.mxu0 %v810
        %1460 = vmatpush.msra.mxu0 %v809
        %1461 = vmatpush.msra.mxu0 %v808
        %1462 = vmatpush.msra.mxu0 %v807
        %1463 = vmatpush.msra.mxu0 %v806
        %1464 = vmatpush.msra.mxu0 %v805
        %1465 = vmatpush.msra.mxu0 %v804
        %1466 = vmatpush.msra.mxu0 %v803
        %1467 = vmatpush.msra.mxu0 %v802
        %1468 = vmatpush.msra.mxu0 %v801
        %1469 = vmatpush.msra.mxu0 %v800
        %1470 = vmatpush.msra.mxu0 %v799
        %1471 = vmatpush.msra.mxu0 %v798
        %1472 = vmatpush.msra.mxu0 %v797
        %1473 = vmatpush.msra.mxu0 %v796
        %1474 = vmatmul.f32.gmra.mxu0 %v314
        %v1475 = vpop.f32.mrf.mxu0
        %v1476 = vadd.f32 %v1456, %v1475
        %1477 = vdwg.mxu0
        %1478 = vmatpush.msra.mxu0 %v827
        %1479 = vmatpush.msra.mxu0 %v826
        %1480 = vmatpush.msra.mxu0 %v825
        %1481 = vmatpush.msra.mxu0 %v824
        %1482 = vmatpush.msra.mxu0 %v823
        %1483 = vmatpush.msra.mxu0 %v822
        %1484 = vmatpush.msra.mxu0 %v821
        %1485 = vmatpush.msra.mxu0 %v820
        %1486 = vmatpush.msra.mxu0 %v819
        %1487 = vmatpush.msra.mxu0 %v818
        %1488 = vmatpush.msra.mxu0 %v817
        %1489 = vmatpush.msra.mxu0 %v816
        %1490 = vmatpush.msra.mxu0 %v815
        %1491 = vmatpush.msra.mxu0 %v814
        %1492 = vmatpush.msra.mxu0 %v813
        %1493 = vmatpush.msra.mxu0 %v812
        %1494 = vmatmul.f32.gmra.mxu0 %v315
        %v1495 = vpop.f32.mrf.mxu0
        %v1496 = vadd.f32 %v1476, %v1495
        %1497 = vdwg.mxu0
        %v1498 = vld [vmem:[%s3] sm:$0x1]
        %v1500 = vperm.slane %v1498, 0
        %v1502 = vadd.f32 %v1496, %v1500
        %1504 = vset.pattern.permute.xlu0 0
        %1505 = vperm.xlu0 %1504, %v857
        %v1506 = vpop.permute.xlu0 %1505
        %v1508 = vmul.f32 %v1502, %v1506
        %vm1509 = vcmask 523264
        %1510 = vst.msk [vmem:[%s270] sm:$0xff] %vm1509, %v1508
        %s1511 = sand.u32 %s169, 1
        %s1512 = scalar_lea.sflag [#allocation3], %s1511
        %s1513 = sand.u32 %s169, 1
        %s1514 = smul.addr %s1513, 8
        %s1515 = scalar_lea.vmem [#allocation2], %s1514
        // Predicated region
        $region45: #{tpu_custom_call.1} parent=43 // pred_check
          %p1516 = pneg %p179
        $region46: #{tpu_custom_call.1} parent=43 // pred_check_branch
          %1518 = sbr.rel (%p1516) target = $region48
        $region47: #{tpu_custom_call.1} parent=43 // pred_region
          %1520 = vsyncadd %s1512, 0
          %s1521 = smul.addr %s20, 8
          %s1522 = scalar_lea.hbm %s6, %s1521
          %s1524 = sshll.u32 %s1515, 4
          %s1525 = int_to_ptr.vmem [resolvable:$true] %s1524
          %s1526 = sshll.u32 %s1522, 4
          %s1527 = int_to_ptr.hbm [resolvable:$true] %s1526
          %1529 = dma.vmem_to_hbm [thread:$0]  %s1525, 128, %s1527, %s1512
        $region48: #{tpu_custom_call.1} parent=43 // pred_fallthru
          _
      $region44: #{tpu_custom_call.1} parent=5 // pred_fallthru
        _
      %p1530 = scmp.le.s32.totalorder 2, %s15
      // Predicated region
      $region49: #{tpu_custom_call.1} parent=5 // pred_check
        %p1531 = pneg %p1530
      $region50: #{tpu_custom_call.1} parent=5 // pred_check_branch
        %1533 = sbr.rel (%p1531) target = $region52
      $region51: #{tpu_custom_call.1} parent=5 // pred_region
        %s1534 = ssub.s32 %s15, 2
        // Predicated region
        $region53: #{tpu_custom_call.1} parent=51 // pred_check
          %p1535 = pneg %p185
        $region54: #{tpu_custom_call.1} parent=51 // pred_check_branch
          %1537 = sbr.rel (%p1535) target = $region56
        $region55: #{tpu_custom_call.1} parent=51 // pred_region
          %s1538 = sand.u32 %s170, 1
          %s1539 = scalar_lea.sflag [#allocation3], %s1538
          %s1540 = sand.u32 %s170, 1
          %s1541 = smul.addr %s1540, 8
          %s1542 = scalar_lea.vmem [#allocation2], %s1541
          %1544 = dma.done %s1539, 128
        $region56: #{tpu_custom_call.1} parent=51 // pred_fallthru
          _
      $region52: #{tpu_custom_call.1} parent=5 // pred_fallthru
        _
    $region6: #{tpu_custom_call.1} parent=1 // loop_footer
      %s19 = sadd.s32 1, %s15
    $region7: #{tpu_custom_call.1} parent=1 // loop_footer_branch
      %14 = sbr.rel target = $region3
    $region8: #{tpu_custom_call.1} parent=1 // loop_exit
      _
    %1545 = vsyncpa [#allocation3], 1
    %s1546 = scalar_lea.sflag [#allocation3], 1
    %1547 = vsyncpa %s1546, 1

</llo_original>
